<compile_context>
chip_gen: v7x
topology: tpu7x:2x2x1
jax: 0.10.0
libtpu: 0.0.40
codegen_flags: <defaults>
</compile_context>

<pallas_src>
import jax
import jax.numpy as jnp
import numpy as np
from jax.experimental import pallas as pl
from jax.experimental.pallas import tpu as pltpu


# Budget for one (input block + output block) pair; doubled for double
# buffering this stays well inside every generation's scoped VMEM once
# vmem_limit_bytes below is applied.
_ROW_TILE_BUDGET_BYTES = 4 * 1024 * 1024
_VMEM_LIMIT_BYTES = 48 * 1024 * 1024


def _dwt_kernel(x_ref, m_ref, o_ref):
    """One (batch, row-tile) step of the Haar DWT.

    x_ref : (1, TR, 2*W)    flattened row p = [even input row | odd input row]
    m_ref : (W, 2*W2)       constant +-0.5 column deinterleave/butterfly matrix
    o_ref : (1, 4, TR, W2)  fused subbands, order [LL, HL, LH, HH]
    """
    w2 = o_ref.shape[-1]
    w = 2 * w2

    x = x_ref[0]                      # (TR, 2*W)
    xe = x[:, :w]                     # even input rows (columns still interleaved)
    xo = x[:, w:]                     # odd  input rows

    m = m_ref[...]
    # Column deinterleave + column butterfly on the MXU:
    #   (. @ m)[:, :W2]  = 0.5 * (even cols + odd cols)
    #   (. @ m)[:, W2:]  = 0.5 * (odd cols  - even cols)
    he = jnp.dot(xe, m, preferred_element_type=jnp.float32,
                 precision=jax.lax.Precision.HIGHEST)
    ho = jnp.dot(xo, m, preferred_element_type=jnp.float32,
                 precision=jax.lax.Precision.HIGHEST)

    # Row butterfly on the VPU.
    ab = he + ho                      # [ LL | HL ]
    dd = ho - he                      # [ LH | HH ]

    dt = o_ref.dtype
    o_ref[0, 0] = ab[:, :w2].astype(dt)    # LL
    o_ref[0, 1] = ab[:, w2:].astype(dt)    # HL
    o_ref[0, 2] = dd[:, :w2].astype(dt)    # LH
    o_ref[0, 3] = dd[:, w2:].astype(dt)    # HH


def _butterfly_matrix(width, dtype):
    """(W, W) matrix: cols [:W/2] = 0.5*(even+odd), cols [W/2:] = 0.5*(odd-even)."""
    w2 = width // 2
    m = np.zeros((width, 2 * w2), dtype=np.float32)
    j = np.arange(w2)
    m[2 * j, j] = 0.5
    m[2 * j + 1, j] = 0.5
    m[2 * j, w2 + j] = -0.5
    m[2 * j + 1, w2 + j] = 0.5
    return jnp.asarray(m, dtype=dtype)


def _choose_row_tile(n_rows, row_bytes):
    """Largest row tile (multiple of 8 sublanes, or full dim) within budget."""
    tr = max(1, _ROW_TILE_BUDGET_BYTES // (2 * row_bytes))   # /2: double buffering
    if tr >= n_rows:
        return n_rows
    return min(n_rows, max(8, (tr // 8) * 8))


@jax.jit
def dwt(x):
    """Forward pass of DWT (dwt_init) for NCHW input; output (B, 4*C, H/2, W/2)."""
    B, C, H, W = x.shape
    assert H % 2 == 0 and W % 2 == 0, "DWT needs even spatial dims"
    H2, W2 = H // 2, W // 2
    R = C * H2                                   # flattened (channel, out-row) axis
    itemsize = jnp.dtype(x.dtype).itemsize

    # Free (bitcast) view: row (c*H2 + i) = [x[b, c, 2i, :], x[b, c, 2i+1, :]].
    xr = x.reshape(B, R, 2 * W)
    m = _butterfly_matrix(W, x.dtype)

    TR = _choose_row_tile(R, row_bytes=2 * (2 * W) * itemsize)  # in + out per row
    grid = (B, pl.cdiv(R, TR))

    out = pl.pallas_call(
        _dwt_kernel,
        out_shape=jax.ShapeDtypeStruct((B, 4, R, W2), x.dtype),
        grid=grid,
        in_specs=[
            pl.BlockSpec((1, TR, 2 * W), lambda b, r: (b, r, 0)),
            pl.BlockSpec((W, 2 * W2), lambda b, r: (0, 0)),
        ],
        out_specs=pl.BlockSpec((1, 4, TR, W2), lambda b, r: (b, 0, r, 0)),
        compiler_params=pltpu.CompilerParams(
            dimension_semantics=("parallel", "parallel"),
            vmem_limit_bytes=_VMEM_LIMIT_BYTES,
        ),
        cost_estimate=pl.CostEstimate(
            flops=4 * B * R * W * (2 * W2) + 2 * B * R * (2 * W2),
            transcendentals=0,
            bytes_accessed=2 * B * C * H * W * itemsize + W * (2 * W2) * itemsize,
        ),
    )(xr, m)

    # Free reshape to the torch.cat((LL, HL, LH, HH), dim=1) layout.
    return out.reshape(B, 4 * C, H2, W2)


def dwt_ref(x):
    """Pure-JAX reference mirroring the PyTorch dwt_init exactly."""
    x01 = x[:, :, 0::2, :] / 2
    x02 = x[:, :, 1::2, :] / 2
    x1 = x01[:, :, :, 0::2]
    x2 = x02[:, :, :, 0::2]
    x3 = x01[:, :, :, 1::2]
    x4 = x02[:, :, :, 1::2]
    x_LL = x1 + x2 + x3 + x4
    x_HL = -x1 - x2 + x3 + x4
    x_LH = -x1 + x2 - x3 + x4
    x_HH = x1 - x2 - x3 + x4
    return jnp.concatenate((x_LL, x_HL, x_LH, x_HH), axis=1)


if __name__ == "__main__":
    key = jax.random.PRNGKey(0)
    B, C, H, W = 2, 4, 16, 16
    x = jax.random.normal(key, (B, C, H, W), dtype=jnp.float32)
    # Keep test values exactly representable in bf16 so the check does not
    # depend on the MXU's f32 pass count (kernel requests HIGHEST precision).
    x = x.astype(jnp.bfloat16).astype(jnp.float32)

    out = jax.block_until_ready(dwt(x))
    ref = dwt_ref(x)
    assert out.shape == (B, 4 * C, H // 2, W // 2), out.shape
    assert jnp.allclose(out, ref, atol=1e-5, rtol=1e-5), "mismatch vs reference"

    # Second, non-square / non-power-of-two shape to exercise other tiling paths.
    x2 = jax.random.normal(jax.random.PRNGKey(1), (1, 3, 24, 40), dtype=jnp.float32)
    x2 = x2.astype(jnp.bfloat16).astype(jnp.float32)
    out2 = jax.block_until_ready(dwt(x2))
    ref2 = dwt_ref(x2)
    assert out2.shape == (1, 12, 12, 20), out2.shape
    assert jnp.allclose(out2, ref2, atol=1e-5, rtol=1e-5), "mismatch vs reference (2)"

    print("KERNEL_OK")
</pallas_src>

<mosaic_0001>
module attributes {stable_mosaic.version = 11 : i64} {
  func.func @_dwt_kernel(%arg0: i32, %arg1: i32, %arg2: memref<1x32x32xf32, #tpu.memory_space<vmem>>, %arg3: memref<16x16xf32, #tpu.memory_space<vmem>>, %arg4: memref<1x4x32x8xf32, #tpu.memory_space<vmem>>) attributes {dimension_semantics = [#tpu.dimension_semantics<parallel>, #tpu.dimension_semantics<parallel>], iteration_bounds = array<i64: 2, 1>, scalar_prefetch = 0 : i64, scratch_operands = 0 : i64, tpu.core_type = #tpu.core_type<tc>, window_params = [{transform_indices = @transform_0, window_bounds = array<i64: 1, 32, 32>}, {pipeline_mode = #tpu.pipeline_mode<synchronous>, transform_indices = @transform_1, window_bounds = array<i64: 16, 16>}, {transform_indices = @transform_2, window_bounds = array<i64: 1, 4, 32, 8>}]} {
    %c0 = arith.constant 0 : index
    %c0_0 = arith.constant 0 : index
    %c0_1 = arith.constant 0 : index
    %0 = vector.load %arg2[%c0, %c0_0, %c0_1] : memref<1x32x32xf32, #tpu.memory_space<vmem>>, vector<1x32x32xf32>
    %1 = vector.shape_cast %0 : vector<1x32x32xf32> to vector<32x32xf32>
    %2 = vector.extract_strided_slice %1 {offsets = [0, 0], sizes = [32, 16], strides = [1, 1]} : vector<32x32xf32> to vector<32x16xf32>
    %3 = vector.extract_strided_slice %1 {offsets = [0, 16], sizes = [32, 16], strides = [1, 1]} : vector<32x32xf32> to vector<32x16xf32>
    %c0_2 = arith.constant 0 : index
    %c0_3 = arith.constant 0 : index
    %4 = vector.load %arg3[%c0_2, %c0_3] : memref<16x16xf32, #tpu.memory_space<vmem>>, vector<16x16xf32>
    %cst = arith.constant dense<0.000000e+00> : vector<32x16xf32>
    %5 = tpu.matmul %2, %4, %cst {dimension_numbers = #tpu.dot_dimension_numbers<[1], [0], [0], [1], [0, 0, 1, 1], [], []>, precision = #tpu.contract_precision<fp32>} : vector<32x16xf32>, vector<16x16xf32>, vector<32x16xf32> -> vector<32x16xf32>
    %cst_4 = arith.constant dense<0.000000e+00> : vector<32x16xf32>
    %6 = tpu.matmul %3, %4, %cst_4 {dimension_numbers = #tpu.dot_dimension_numbers<[1], [0], [0], [1], [0, 0, 1, 1], [], []>, precision = #tpu.contract_precision<fp32>} : vector<32x16xf32>, vector<16x16xf32>, vector<32x16xf32> -> vector<32x16xf32>
    %7 = arith.addf %5, %6 : vector<32x16xf32>
    %8 = arith.subf %6, %5 : vector<32x16xf32>
    %9 = vector.extract_strided_slice %7 {offsets = [0, 0], sizes = [32, 8], strides = [1, 1]} : vector<32x16xf32> to vector<32x8xf32>
    %c0_5 = arith.constant 0 : index
    %c0_6 = arith.constant 0 : index
    %c0_7 = arith.constant 0 : index
    %c0_8 = arith.constant 0 : index
    %10 = vector.load %arg4[%c0_5, %c0_6, %c0_7, %c0_8] : memref<1x4x32x8xf32, #tpu.memory_space<vmem>>, vector<1x1x32x8xf32>
    %11 = vector.shape_cast %10 : vector<1x1x32x8xf32> to vector<32x8xf32>
    %12 = vector.shape_cast %9 : vector<32x8xf32> to vector<1x1x32x8xf32>
    tpu.vector_store %arg4[%c0_5, %c0_6, %c0_7, %c0_8], %12 {strides = array<i32>} : memref<1x4x32x8xf32, #tpu.memory_space<vmem>>, vector<1x1x32x8xf32>,
    %13 = vector.extract_strided_slice %7 {offsets = [0, 8], sizes = [32, 8], strides = [1, 1]} : vector<32x16xf32> to vector<32x8xf32>
    %c0_9 = arith.constant 0 : index
    %c1 = arith.constant 1 : index
    %c0_10 = arith.constant 0 : index
    %c0_11 = arith.constant 0 : index
    %14 = vector.load %arg4[%c0_9, %c1, %c0_10, %c0_11] : memref<1x4x32x8xf32, #tpu.memory_space<vmem>>, vector<1x1x32x8xf32>
    %15 = vector.shape_cast %14 : vector<1x1x32x8xf32> to vector<32x8xf32>
    %16 = vector.shape_cast %13 : vector<32x8xf32> to vector<1x1x32x8xf32>
    tpu.vector_store %arg4[%c0_9, %c1, %c0_10, %c0_11], %16 {strides = array<i32>} : memref<1x4x32x8xf32, #tpu.memory_space<vmem>>, vector<1x1x32x8xf32>,
    %17 = vector.extract_strided_slice %8 {offsets = [0, 0], sizes = [32, 8], strides = [1, 1]} : vector<32x16xf32> to vector<32x8xf32>
    %c0_12 = arith.constant 0 : index
    %c2 = arith.constant 2 : index
    %c0_13 = arith.constant 0 : index
    %c0_14 = arith.constant 0 : index
    %18 = vector.load %arg4[%c0_12, %c2, %c0_13, %c0_14] : memref<1x4x32x8xf32, #tpu.memory_space<vmem>>, vector<1x1x32x8xf32>
    %19 = vector.shape_cast %18 : vector<1x1x32x8xf32> to vector<32x8xf32>
    %20 = vector.shape_cast %17 : vector<32x8xf32> to vector<1x1x32x8xf32>
    tpu.vector_store %arg4[%c0_12, %c2, %c0_13, %c0_14], %20 {strides = array<i32>} : memref<1x4x32x8xf32, #tpu.memory_space<vmem>>, vector<1x1x32x8xf32>,
    %21 = vector.extract_strided_slice %8 {offsets = [0, 8], sizes = [32, 8], strides = [1, 1]} : vector<32x16xf32> to vector<32x8xf32>
    %c0_15 = arith.constant 0 : index
    %c3 = arith.constant 3 : index
    %c0_16 = arith.constant 0 : index
    %c0_17 = arith.constant 0 : index
    %22 = vector.load %arg4[%c0_15, %c3, %c0_16, %c0_17] : memref<1x4x32x8xf32, #tpu.memory_space<vmem>>, vector<1x1x32x8xf32>
    %23 = vector.shape_cast %22 : vector<1x1x32x8xf32> to vector<32x8xf32>
    %24 = vector.shape_cast %21 : vector<32x8xf32> to vector<1x1x32x8xf32>
    tpu.vector_store %arg4[%c0_15, %c3, %c0_16, %c0_17], %24 {strides = array<i32>} : memref<1x4x32x8xf32, #tpu.memory_space<vmem>>, vector<1x1x32x8xf32>,
    return
  }
  func.func @transform_0(%arg0: i32, %arg1: i32) -> (i32, i32, i32) {
    %c0_i32 = arith.constant 0 : i32
    %c0_i32_0 = arith.constant 0 : i32
    return %arg0, %arg1, %c0_i32 : i32, i32, i32
  }
  func.func @transform_1(%arg0: i32, %arg1: i32) -> (i32, i32) {
    %c0_i32 = arith.constant 0 : i32
    %c0_i32_0 = arith.constant 0 : i32
    %c0_i32_1 = arith.constant 0 : i32
    return %c0_i32, %c0_i32_0 : i32, i32
  }
  func.func @transform_2(%arg0: i32, %arg1: i32) -> (i32, i32, i32, i32) {
    %c0_i32 = arith.constant 0 : i32
    %c0_i32_0 = arith.constant 0 : i32
    %c0_i32_1 = arith.constant 0 : i32
    return %arg0, %c0_i32, %arg1, %c0_i32_0 : i32, i32, i32, i32
  }
}

</mosaic_0001>

<llo_original>
// kernel: dwt.1
$region0: #{dwt.1}
  #allocation0 [shape = 'u32[]', space=smem, size = 0x4, offset = 0x4, fixed_abs, tag = 'smem constant byte address 0x4 - core index']
  #allocation1 [shape = 'u32[144,128]{1,0:T(1,128)}', space=vmem, size = 0x12000, scoped, tag = 'internal scratch']
  %s0 = inlined_call_operand.vmem [shape: f32[2,32,32], index: 0, kind: input, shape index: {}]
  %s1 = inlined_call_operand.vmem [shape: f32[16,16], index: 1, kind: input, shape index: {}]
  %s2 = inlined_call_operand.vmem [shape: f32[2,4,32,8], index: 2, kind: output, shape index: {}]
  %s3 = sld [smem:[#allocation0]]
  $region41: #{dwt.1} parent=0
    _
  %s5 = ssub.s32 1, %s3
  %s6 = scalar_select 0, %s5, %s3
  loop: start=0, step=1, limit=4
  $region2: #{dwt.1} parent=0 // loop_pre_header
    _
  $region3: #{dwt.1} parent=0 // loop_header
    %s8 = sphi 0, %s12
    %p9 = scmp.ge.s32.totalorder %s8, 4
    %s15 = sphi 0, %s27
    %s16 = sphi 0, %s23
    %s17 = sphi 0, %s15
    %s18 = sphi 0, %s16
    %s19 = sphi 0, %s17
    %s20 = sphi 0, %s18
    %s32 = sphi 0, %s34
    %s35 = sphi 0, %s32
    %s36 = sphi 0, %s35
    %s52 = sphi 0, %s36
    %s56 = sphi 0, %s56
    %s58 = sphi 0, %s56
    %s59 = sphi 0, %s58
    %s73 = sphi 0, %s59
    %s81 = sphi 0, %s83
    %s84 = sphi 0, %s81
    %s85 = sphi 0, %s84
    %s101 = sphi 0, %s85
  $region4: #{dwt.1} parent=0 // loop_header_branch
    %11 = sbr.rel (%p9) target = $region8
  $region5: #{dwt.1} parent=0 // loop_body
    %s13 = ssub.s32 %s8, 1
    %s14 = ssub.s32 %s8, 2
    %s21 = sadd.s32 1, %s16
    %p22 = scmp.ge.s32.totalorder %s21, 1
    %s23 = scalar_select %p22, 0, %s21
    %s24 = sadd.s32 1, %s15
    %s25 = scalar_select %p22, %s24, %s15
    %p26 = scmp.ge.s32.totalorder %s25, 2
    %s27 = scalar_select %p26, 0, %s25
    %s28 = ssub.s32 %s15, %s27
    %s29 = ssub.s32 %s16, %s23
    %s30 = sor.u32 %s28, %s29
    %p31 = scmp.eq.s32.totalorder %s30, 0
    %s33 = sadd.s32 %s32, 1
    %s34 = scalar_select %p31, %s32, %s33
    %p37 = pneg %p31
    %p38 = scmp.eq.s32.totalorder %s8, 1
    %p39 = por %p37, %p38
    %p40 = scmp.ne.s32.totalorder %s32, %s35
    %p41 = scmp.eq.s32.totalorder %s8, 0
    %p42 = por %p40, %p41
    %p43 = scmp.ne.s32.totalorder %s32, %s35
    %p44 = scmp.eq.s32.totalorder %s13, 1
    %p45 = por %p43, %p44
    %p46 = scmp.ne.s32.totalorder %s35, %s36
    %p47 = scmp.eq.s32.totalorder %s13, 0
    %p48 = por %p46, %p47
    %p49 = scmp.ne.s32.totalorder %s35, %s36
    %p50 = scmp.eq.s32.totalorder %s14, 1
    %p51 = por %p49, %p50
    %p53 = scmp.ne.s32.totalorder %s36, %s52
    %p54 = scmp.eq.s32.totalorder %s14, 0
    %p55 = por %p53, %p54
    %s57 = sadd.s32 %s56, 1
    %p60 = scmp.eq.s32.totalorder %s8, 1
    %p61 = scmp.ne.s32.totalorder %s56, %s58
    %p62 = scmp.eq.s32.totalorder %s8, 0
    %p63 = por %p61, %p62
    %p64 = scmp.ne.s32.totalorder %s56, %s58
    %p65 = scmp.eq.s32.totalorder %s13, 1
    %p66 = por %p64, %p65
    %p67 = scmp.ne.s32.totalorder %s58, %s59
    %p68 = scmp.eq.s32.totalorder %s13, 0
    %p69 = por %p67, %p68
    %p70 = scmp.ne.s32.totalorder %s58, %s59
    %p71 = scmp.eq.s32.totalorder %s14, 1
    %p72 = por %p70, %p71
    %p74 = scmp.ne.s32.totalorder %s59, %s73
    %p75 = scmp.eq.s32.totalorder %s14, 0
    %p76 = por %p74, %p75
    %s77 = ssub.s32 %s15, %s27
    %s78 = ssub.s32 %s16, %s23
    %s79 = sor.u32 %s77, %s78
    %p80 = scmp.eq.s32.totalorder %s79, 0
    %s82 = sadd.s32 %s81, 1
    %s83 = scalar_select %p80, %s81, %s82
    %p86 = pneg %p80
    %p87 = scmp.eq.s32.totalorder %s8, 1
    %p88 = por %p86, %p87
    %p89 = scmp.ne.s32.totalorder %s81, %s84
    %p90 = scmp.eq.s32.totalorder %s8, 0
    %p91 = por %p89, %p90
    %p92 = scmp.ne.s32.totalorder %s81, %s84
    %p93 = scmp.eq.s32.totalorder %s13, 1
    %p94 = por %p92, %p93
    %p95 = scmp.ne.s32.totalorder %s84, %s85
    %p96 = scmp.eq.s32.totalorder %s13, 0
    %p97 = por %p95, %p96
    %p98 = scmp.ne.s32.totalorder %s84, %s85
    %p99 = scmp.eq.s32.totalorder %s14, 1
    %p100 = por %p98, %p99
    %p102 = scmp.ne.s32.totalorder %s85, %s101
    %p103 = scmp.eq.s32.totalorder %s14, 0
    %p104 = por %p102, %p103
    %p105 = scmp.le.s32.totalorder 1, %s8
    %p106 = scmp.lt.s32.totalorder %s8, 3
    %p107 = pnand %p105, %p106
    %p108 = pneg %p107
    // Predicated region
    $region9: #{dwt.1} parent=5 // pred_check
      _
    $region10: #{dwt.1} parent=5 // pred_check_branch
      %110 = sbr.rel (%p107) target = $region12
    $region11: #{dwt.1} parent=5 // pred_region
      %s111 = ssub.s32 %s8, 1
      // Predicated region
      $region13: #{dwt.1} parent=11 // pred_check
        %p112 = pneg %p69
      $region14: #{dwt.1} parent=11 // pred_check_branch
        %114 = sbr.rel (%p112) target = $region16
      $region15: #{dwt.1} parent=11 // pred_region
        _
      $region16: #{dwt.1} parent=11 // pred_fallthru
        _
    $region12: #{dwt.1} parent=5 // pred_fallthru
      _
    %p115 = scmp.lt.s32.totalorder %s8, 2
    // Predicated region
    $region17: #{dwt.1} parent=5 // pred_check
      %p116 = pneg %p115
    $region18: #{dwt.1} parent=5 // pred_check_branch
      %118 = sbr.rel (%p116) target = $region20
    $region19: #{dwt.1} parent=5 // pred_region
      // Predicated region
      $region21: #{dwt.1} parent=19 // pred_check
        %p119 = pneg %p42
      $region22: #{dwt.1} parent=19 // pred_check_branch
        %121 = sbr.rel (%p119) target = $region24
      $region23: #{dwt.1} parent=19 // pred_region
        %s122 = smul.u32 4, %s16
        %p123 = scmp.lt.s32.totalorder %s15, 1
        %s124 = scalar_select %p123, %s15, 1
        %p125 = scmp.lt.s32.totalorder %s122, 3
        %s126 = scalar_select %p125, %s122, 3
        %s127 = smul.addr %s124, 4
        %s128 = sadd.s32 %s126, %s127
        %s129 = smul.addr %s128, 8
        %s130 = scalar_lea.vmem %s0, %s129
        %s131 = smul.u32 4, %s16
      $region24: #{dwt.1} parent=19 // pred_fallthru
        _
    $region20: #{dwt.1} parent=5 // pred_fallthru
      _
    %p132 = scmp.le.s32.totalorder 1, %s8
    %p133 = scmp.lt.s32.totalorder %s8, 3
    %p134 = pnand %p132, %p133
    %p135 = pneg %p134
    // Predicated region
    $region25: #{dwt.1} parent=5 // pred_check
      _
    $region26: #{dwt.1} parent=5 // pred_check_branch
      %137 = sbr.rel (%p134) target = $region28
    $region27: #{dwt.1} parent=5 // pred_region
      %s138 = ssub.s32 %s8, 1
      %s139 = smul.u32 4, %s18
      %p140 = scmp.lt.s32.totalorder %s17, 1
      %s141 = scalar_select %p140, %s17, 1
      %p142 = scmp.lt.s32.totalorder %s139, 3
      %s143 = scalar_select %p142, %s139, 3
      %s144 = smul.addr %s141, 4
      %s145 = sadd.s32 %s143, %s144
      %s146 = smul.addr %s145, 8
      %s147 = scalar_lea.vmem %s0, %s146
      %p148 = pneg %p48
      %p149 = pneg %p45
      %p150 = pneg %p69
      %p151 = pneg %p66
      %p152 = pneg %p97
      %p153 = pneg %p94
      %s154 = smul.u32 4, %s18
      %p155 = scmp.lt.s32.totalorder %s17, 1
      %s156 = scalar_select %p155, %s17, 1
      %p157 = scmp.lt.s32.totalorder %s154, 3
      %s158 = scalar_select %p157, %s154, 3
      %s159 = smul.addr %s156, 16
      %s160 = sadd.s32 %s158, %s159
      %s161 = smul.addr %s160, 8
      %s162 = scalar_lea.vmem %s2, %s161
      %s163 = smul.u32 4, %s18
      %p164 = scmp.lt.s32.totalorder %s17, 1
      %s165 = scalar_select %p164, %s17, 1
      %p166 = scmp.lt.s32.totalorder %s163, 3
      %s167 = scalar_select %p166, %s163, 3
      %s168 = smul.addr %s165, 4
      %s169 = sadd.s32 %s167, %s168
      %s170 = smul.addr %s169, 8
      %s171 = scalar_lea.vmem %s0, %s170
      %s172 = smul.u32 4, %s18
      %s173 = smul.u32 4, %s18
      %p174 = scmp.lt.s32.totalorder %s17, 1
      %s175 = scalar_select %p174, %s17, 1
      %p176 = scmp.lt.s32.totalorder %s173, 3
      %s177 = scalar_select %p176, %s173, 3
      %s178 = smul.addr %s175, 16
      %s179 = sadd.s32 %s177, %s178
      %s180 = smul.addr %s179, 8
      %s181 = scalar_lea.vmem %s2, %s180
      %s182 = smul.u32 4, %s18
      %v183 = vld [vmem:[%s171] sm:$0xff]
      %v184 = vld [vmem:[%s171 + $0x8] sm:$0xff]
      %v185 = vld [vmem:[%s171 + $0x10] sm:$0xff]
      %v186 = vld [vmem:[%s171 + $0x18] sm:$0xff]
      %v187 = vld [vmem:[%s1] sm:$0xff]
      %v188 = vld [vmem:[%s1 + $0x8] sm:$0xff]
      %vm189 = vcmask 130048
      %v191 = vsel %vm189, %v183, 0
      %v194 = vsel %vm189, %v184, 0
      %v197 = vsel %vm189, %v185, 0
      %v200 = vsel %vm189, %v186, 0
      %202 = vmatprep.subr.mxu0 0.0
      %v203 = vand.u32 %v187, 4294901760
      %204 = vmatpush1.msra.mxu0 %v203
      %205 = vmatprep.subr.mxu0 0.0
      %v206 = vand.u32 %v188, 4294901760
      %207 = vmatpush1.msra.mxu0 %v206
      %208 = vmatprep.subr.mxu0 0.0
      %209 = vmatpush1.msra.mxu0 0.0
      %210 = vmatprep.subr.mxu0 0.0
      %211 = vmatpush1.msra.mxu0 0.0
      %212 = vmatprep.subr.mxu0 0.0
      %213 = vmatpush1.msra.mxu0 0.0
      %214 = vmatprep.subr.mxu0 0.0
      %215 = vmatpush1.msra.mxu0 0.0
      %216 = vmatprep.subr.mxu0 0.0
      %217 = vmatpush1.msra.mxu0 0.0
      %218 = vmatprep.subr.mxu0 0.0
      %219 = vmatpush1.msra.mxu0 0.0
      %220 = vmatprep.subr.mxu0 0.0
      %221 = vmatpush1.msra.mxu0 0.0
      %222 = vmatprep.subr.mxu0 0.0
      %223 = vmatpush1.msra.mxu0 0.0
      %224 = vmatprep.subr.mxu0 0.0
      %225 = vmatpush1.msra.mxu0 0.0
      %226 = vmatprep.subr.mxu0 0.0
      %227 = vmatpush1.msra.mxu0 0.0
      %228 = vmatprep.subr.mxu0 0.0
      %229 = vmatpush1.msra.mxu0 0.0
      %230 = vmatprep.subr.mxu0 0.0
      %231 = vmatpush1.msra.mxu0 0.0
      %232 = vmatprep.subr.mxu0 0.0
      %233 = vmatpush1.msra.mxu0 0.0
      %234 = vmatprep.subr.mxu0 0.0
      %235 = vmatpush1.msra.mxu0 0.0
      %236 = vmatprep.subr.mxu0 0.0
      %237 = vmatpush1.msra.mxu0 0.0
      %238 = vmatprep.subr.mxu0 0.0
      %239 = vmatpush1.msra.mxu0 0.0
      %240 = vmatprep.subr.mxu0 0.0
      %241 = vmatpush1.msra.mxu0 0.0
      %242 = vmatprep.subr.mxu0 0.0
      %243 = vmatpush1.msra.mxu0 0.0
      %244 = vmatprep.subr.mxu0 0.0
      %245 = vmatpush1.msra.mxu0 0.0
      %246 = vmatprep.subr.mxu0 0.0
      %247 = vmatpush1.msra.mxu0 0.0
      %248 = vmatprep.subr.mxu0 0.0
      %249 = vmatpush1.msra.mxu0 0.0
      %250 = vmatprep.subr.mxu0 0.0
      %251 = vmatpush1.msra.mxu0 0.0
      %252 = vmatprep.subr.mxu0 0.0
      %253 = vmatpush1.msra.mxu0 0.0
      %254 = vmatprep.subr.mxu0 0.0
      %255 = vmatpush1.msra.mxu0 0.0
      %256 = vmatprep.subr.mxu0 0.0
      %257 = vmatpush1.msra.mxu0 0.0
      %258 = vmatprep.subr.mxu0 0.0
      %259 = vmatpush1.msra.mxu0 0.0
      %260 = vmatprep.subr.mxu0 0.0
      %261 = vmatpush1.msra.mxu0 0.0
      %262 = vmatprep.subr.mxu0 0.0
      %263 = vmatpush1.msra.mxu0 0.0
      %264 = vmatprep.subr.mxu0 0.0
      %265 = vmatpush1.msra.mxu0 0.0
      %266 = vmatprep.subr.mxu0 0.0
      %267 = vmatpush1.msra.mxu0 0.0
      %268 = vmatprep.mubr.f32.mxu0 0.0
      %v269 = vand.u32 %v191, 4294901760
      %v270 = vsub.f32 %v191, %v269
      %v271 = vand.u32 %v270, 4294901760
      %v272 = vsub.f32 %v270, %v271
      %v273 = vand.u32 %v272, 4294901760
      %274 = vmatmul.mubr.f32.gmra.mrb[0].mxu0 %v273
      %v275 = vpop.f32.mrb[0].mxu0
      %v276 = vadd.f32 0.0, %v275
      %v277 = vpop.f32.mrb[0].mxu0
      %278 = vmatprep.mubr.f32.mxu0 0.0
      %v279 = vand.u32 %v194, 4294901760
      %v280 = vsub.f32 %v194, %v279
      %v281 = vand.u32 %v280, 4294901760
      %v282 = vsub.f32 %v280, %v281
      %v283 = vand.u32 %v282, 4294901760
      %284 = vmatmul.mubr.f32.gmra.mrb[0].mxu0 %v283
      %v285 = vpop.f32.mrb[0].mxu0
      %v286 = vadd.f32 0.0, %v285
      %v287 = vpop.f32.mrb[0].mxu0
      %288 = vmatprep.mubr.f32.mxu0 0.0
      %v289 = vand.u32 %v197, 4294901760
      %v290 = vsub.f32 %v197, %v289
      %v291 = vand.u32 %v290, 4294901760
      %v292 = vsub.f32 %v290, %v291
      %v293 = vand.u32 %v292, 4294901760
      %294 = vmatmul.mubr.f32.gmra.mrb[0].mxu0 %v293
      %v295 = vpop.f32.mrb[0].mxu0
      %v296 = vadd.f32 0.0, %v295
      %v297 = vpop.f32.mrb[0].mxu0
      %298 = vmatprep.mubr.f32.mxu0 0.0
      %v299 = vand.u32 %v200, 4294901760
      %v300 = vsub.f32 %v200, %v299
      %v301 = vand.u32 %v300, 4294901760
      %v302 = vsub.f32 %v300, %v301
      %v303 = vand.u32 %v302, 4294901760
      %304 = vmatmul.mubr.f32.gmra.mrb[0].mxu0 %v303
      %v305 = vpop.f32.mrb[0].mxu0
      %v306 = vadd.f32 0.0, %v305
      %v307 = vpop.f32.mrb[0].mxu0
      %308 = vdwg.mxu0
      %309 = vmatprep.subr.mxu0 0.0
      %v310 = vand.u32 %v187, 4294901760
      %v311 = vsub.f32 %v187, %v310
      %v312 = vand.u32 %v311, 4294901760
      %v313 = vsub.f32 %v311, %v312
      %v314 = vand.u32 %v313, 4294901760
      %315 = vmatpush1.msra.mxu0 %v314
      %316 = vmatprep.subr.mxu0 0.0
      %v317 = vand.u32 %v188, 4294901760
      %v318 = vsub.f32 %v188, %v317
      %v319 = vand.u32 %v318, 4294901760
      %v320 = vsub.f32 %v318, %v319
      %v321 = vand.u32 %v320, 4294901760
      %322 = vmatpush1.msra.mxu0 %v321
      %323 = vmatprep.subr.mxu0 0.0
      %324 = vmatpush1.msra.mxu0 0.0
      %325 = vmatprep.subr.mxu0 0.0
      %326 = vmatpush1.msra.mxu0 0.0
      %327 = vmatprep.subr.mxu0 0.0
      %328 = vmatpush1.msra.mxu0 0.0
      %329 = vmatprep.subr.mxu0 0.0
      %330 = vmatpush1.msra.mxu0 0.0
      %331 = vmatprep.subr.mxu0 0.0
      %332 = vmatpush1.msra.mxu0 0.0
      %333 = vmatprep.subr.mxu0 0.0
      %334 = vmatpush1.msra.mxu0 0.0
      %335 = vmatprep.subr.mxu0 0.0
      %336 = vmatpush1.msra.mxu0 0.0
      %337 = vmatprep.subr.mxu0 0.0
      %338 = vmatpush1.msra.mxu0 0.0
      %339 = vmatprep.subr.mxu0 0.0
      %340 = vmatpush1.msra.mxu0 0.0
      %341 = vmatprep.subr.mxu0 0.0
      %342 = vmatpush1.msra.mxu0 0.0
      %343 = vmatprep.subr.mxu0 0.0
      %344 = vmatpush1.msra.mxu0 0.0
      %345 = vmatprep.subr.mxu0 0.0
      %346 = vmatpush1.msra.mxu0 0.0
      %347 = vmatprep.subr.mxu0 0.0
      %348 = vmatpush1.msra.mxu0 0.0
      %349 = vmatprep.subr.mxu0 0.0
      %350 = vmatpush1.msra.mxu0 0.0
      %351 = vmatprep.subr.mxu0 0.0
      %352 = vmatpush1.msra.mxu0 0.0
      %353 = vmatprep.subr.mxu0 0.0
      %354 = vmatpush1.msra.mxu0 0.0
      %355 = vmatprep.subr.mxu0 0.0
      %356 = vmatpush1.msra.mxu0 0.0
      %357 = vmatprep.subr.mxu0 0.0
      %358 = vmatpush1.msra.mxu0 0.0
      %359 = vmatprep.subr.mxu0 0.0
      %360 = vmatpush1.msra.mxu0 0.0
      %361 = vmatprep.subr.mxu0 0.0
      %362 = vmatpush1.msra.mxu0 0.0
      %363 = vmatprep.subr.mxu0 0.0
      %364 = vmatpush1.msra.mxu0 0.0
      %365 = vmatprep.subr.mxu0 0.0
      %366 = vmatpush1.msra.mxu0 0.0
      %367 = vmatprep.subr.mxu0 0.0
      %368 = vmatpush1.msra.mxu0 0.0
      %369 = vmatprep.subr.mxu0 0.0
      %370 = vmatpush1.msra.mxu0 0.0
      %371 = vmatprep.subr.mxu0 0.0
      %372 = vmatpush1.msra.mxu0 0.0
      %373 = vmatprep.subr.mxu0 0.0
      %374 = vmatpush1.msra.mxu0 0.0
      %375 = vmatprep.subr.mxu0 0.0
      %376 = vmatpush1.msra.mxu0 0.0
      %377 = vmatprep.subr.mxu0 0.0
      %378 = vmatpush1.msra.mxu0 0.0
      %379 = vmatprep.subr.mxu0 0.0
      %380 = vmatpush1.msra.mxu0 0.0
      %381 = vmatprep.subr.mxu0 0.0
      %382 = vmatpush1.msra.mxu0 0.0
      %383 = vmatprep.mubr.f32.mxu0 0.0
      %v384 = vand.u32 %v191, 4294901760
      %385 = vmatmul.mubr.f32.gmra.mrb[0].mxu0 %v384
      %v386 = vpop.f32.mrb[0].mxu0
      %v387 = vadd.f32 %v276, %v386
      %v388 = vpop.f32.mrb[0].mxu0
      %389 = vmatprep.mubr.f32.mxu0 0.0
      %v390 = vand.u32 %v194, 4294901760
      %391 = vmatmul.mubr.f32.gmra.mrb[0].mxu0 %v390
      %v392 = vpop.f32.mrb[0].mxu0
      %v393 = vadd.f32 %v286, %v392
      %v394 = vpop.f32.mrb[0].mxu0
      %395 = vmatprep.mubr.f32.mxu0 0.0
      %v396 = vand.u32 %v197, 4294901760
      %397 = vmatmul.mubr.f32.gmra.mrb[0].mxu0 %v396
      %v398 = vpop.f32.mrb[0].mxu0
      %v399 = vadd.f32 %v296, %v398
      %v400 = vpop.f32.mrb[0].mxu0
      %401 = vmatprep.mubr.f32.mxu0 0.0
      %v402 = vand.u32 %v200, 4294901760
      %403 = vmatmul.mubr.f32.gmra.mrb[0].mxu0 %v402
      %v404 = vpop.f32.mrb[0].mxu0
      %v405 = vadd.f32 %v306, %v404
      %v406 = vpop.f32.mrb[0].mxu0
      %407 = vdwg.mxu0
      %408 = vmatprep.subr.mxu0 0.0
      %v409 = vand.u32 %v187, 4294901760
      %v410 = vsub.f32 %v187, %v409
      %411 = vmatpush1.msra.mxu0 %v410
      %412 = vmatprep.subr.mxu0 0.0
      %v413 = vand.u32 %v188, 4294901760
      %v414 = vsub.f32 %v188, %v413
      %415 = vmatpush1.msra.mxu0 %v414
      %416 = vmatprep.subr.mxu0 0.0
      %417 = vmatpush1.msra.mxu0 0.0
      %418 = vmatprep.subr.mxu0 0.0
      %419 = vmatpush1.msra.mxu0 0.0
      %420 = vmatprep.subr.mxu0 0.0
      %421 = vmatpush1.msra.mxu0 0.0
      %422 = vmatprep.subr.mxu0 0.0
      %423 = vmatpush1.msra.mxu0 0.0
      %424 = vmatprep.subr.mxu0 0.0
      %425 = vmatpush1.msra.mxu0 0.0
      %426 = vmatprep.subr.mxu0 0.0
      %427 = vmatpush1.msra.mxu0 0.0
      %428 = vmatprep.subr.mxu0 0.0
      %429 = vmatpush1.msra.mxu0 0.0
      %430 = vmatprep.subr.mxu0 0.0
      %431 = vmatpush1.msra.mxu0 0.0
      %432 = vmatprep.subr.mxu0 0.0
      %433 = vmatpush1.msra.mxu0 0.0
      %434 = vmatprep.subr.mxu0 0.0
      %435 = vmatpush1.msra.mxu0 0.0
      %436 = vmatprep.subr.mxu0 0.0
      %437 = vmatpush1.msra.mxu0 0.0
      %438 = vmatprep.subr.mxu0 0.0
      %439 = vmatpush1.msra.mxu0 0.0
      %440 = vmatprep.subr.mxu0 0.0
      %441 = vmatpush1.msra.mxu0 0.0
      %442 = vmatprep.subr.mxu0 0.0
      %443 = vmatpush1.msra.mxu0 0.0
      %444 = vmatprep.subr.mxu0 0.0
      %445 = vmatpush1.msra.mxu0 0.0
      %446 = vmatprep.subr.mxu0 0.0
      %447 = vmatpush1.msra.mxu0 0.0
      %448 = vmatprep.subr.mxu0 0.0
      %449 = vmatpush1.msra.mxu0 0.0
      %450 = vmatprep.subr.mxu0 0.0
      %451 = vmatpush1.msra.mxu0 0.0
      %452 = vmatprep.subr.mxu0 0.0
      %453 = vmatpush1.msra.mxu0 0.0
      %454 = vmatprep.subr.mxu0 0.0
      %455 = vmatpush1.msra.mxu0 0.0
      %456 = vmatprep.subr.mxu0 0.0
      %457 = vmatpush1.msra.mxu0 0.0
      %458 = vmatprep.subr.mxu0 0.0
      %459 = vmatpush1.msra.mxu0 0.0
      %460 = vmatprep.subr.mxu0 0.0
      %461 = vmatpush1.msra.mxu0 0.0
      %462 = vmatprep.subr.mxu0 0.0
      %463 = vmatpush1.msra.mxu0 0.0
      %464 = vmatprep.subr.mxu0 0.0
      %465 = vmatpush1.msra.mxu0 0.0
      %466 = vmatprep.subr.mxu0 0.0
      %467 = vmatpush1.msra.mxu0 0.0
      %468 = vmatprep.subr.mxu0 0.0
      %469 = vmatpush1.msra.mxu0 0.0
      %470 = vmatprep.subr.mxu0 0.0
      %471 = vmatpush1.msra.mxu0 0.0
      %472 = vmatprep.subr.mxu0 0.0
      %473 = vmatpush1.msra.mxu0 0.0
      %474 = vmatprep.subr.mxu0 0.0
      %475 = vmatpush1.msra.mxu0 0.0
      %476 = vmatprep.mubr.f32.mxu0 0.0
      %v477 = vand.u32 %v191, 4294901760
      %v478 = vsub.f32 %v191, %v477
      %479 = vmatmul.mubr.f32.gmra.mrb[0].mxu0 %v478
      %v480 = vpop.f32.mrb[0].mxu0
      %v481 = vadd.f32 %v387, %v480
      %v482 = vpop.f32.mrb[0].mxu0
      %483 = vmatprep.mubr.f32.mxu0 0.0
      %v484 = vand.u32 %v194, 4294901760
      %v485 = vsub.f32 %v194, %v484
      %486 = vmatmul.mubr.f32.gmra.mrb[0].mxu0 %v485
      %v487 = vpop.f32.mrb[0].mxu0
      %v488 = vadd.f32 %v393, %v487
      %v489 = vpop.f32.mrb[0].mxu0
      %490 = vmatprep.mubr.f32.mxu0 0.0
      %v491 = vand.u32 %v197, 4294901760
      %v492 = vsub.f32 %v197, %v491
      %493 = vmatmul.mubr.f32.gmra.mrb[0].mxu0 %v492
      %v494 = vpop.f32.mrb[0].mxu0
      %v495 = vadd.f32 %v399, %v494
      %v496 = vpop.f32.mrb[0].mxu0
      %497 = vmatprep.mubr.f32.mxu0 0.0
      %v498 = vand.u32 %v200, 4294901760
      %v499 = vsub.f32 %v200, %v498
      %500 = vmatmul.mubr.f32.gmra.mrb[0].mxu0 %v499
      %v501 = vpop.f32.mrb[0].mxu0
      %v502 = vadd.f32 %v405, %v501
      %v503 = vpop.f32.mrb[0].mxu0
      %504 = vdwg.mxu0
      %505 = vmatprep.subr.mxu0 0.0
      %v506 = vand.u32 %v187, 4294901760
      %507 = vmatpush1.msra.mxu0 %v506
      %508 = vmatprep.subr.mxu0 0.0
      %v509 = vand.u32 %v188, 4294901760
      %510 = vmatpush1.msra.mxu0 %v509
      %511 = vmatprep.subr.mxu0 0.0
      %512 = vmatpush1.msra.mxu0 0.0
      %513 = vmatprep.subr.mxu0 0.0
      %514 = vmatpush1.msra.mxu0 0.0
      %515 = vmatprep.subr.mxu0 0.0
      %516 = vmatpush1.msra.mxu0 0.0
      %517 = vmatprep.subr.mxu0 0.0
      %518 = vmatpush1.msra.mxu0 0.0
      %519 = vmatprep.subr.mxu0 0.0
      %520 = vmatpush1.msra.mxu0 0.0
      %521 = vmatprep.subr.mxu0 0.0
      %522 = vmatpush1.msra.mxu0 0.0
      %523 = vmatprep.subr.mxu0 0.0
      %524 = vmatpush1.msra.mxu0 0.0
      %525 = vmatprep.subr.mxu0 0.0
      %526 = vmatpush1.msra.mxu0 0.0
      %527 = vmatprep.subr.mxu0 0.0
      %528 = vmatpush1.msra.mxu0 0.0
      %529 = vmatprep.subr.mxu0 0.0
      %530 = vmatpush1.msra.mxu0 0.0
      %531 = vmatprep.subr.mxu0 0.0
      %532 = vmatpush1.msra.mxu0 0.0
      %533 = vmatprep.subr.mxu0 0.0
      %534 = vmatpush1.msra.mxu0 0.0
      %535 = vmatprep.subr.mxu0 0.0
      %536 = vmatpush1.msra.mxu0 0.0
      %537 = vmatprep.subr.mxu0 0.0
      %538 = vmatpush1.msra.mxu0 0.0
      %539 = vmatprep.subr.mxu0 0.0
      %540 = vmatpush1.msra.mxu0 0.0
      %541 = vmatprep.subr.mxu0 0.0
      %542 = vmatpush1.msra.mxu0 0.0
      %543 = vmatprep.subr.mxu0 0.0
      %544 = vmatpush1.msra.mxu0 0.0
      %545 = vmatprep.subr.mxu0 0.0
      %546 = vmatpush1.msra.mxu0 0.0
      %547 = vmatprep.subr.mxu0 0.0
      %548 = vmatpush1.msra.mxu0 0.0
      %549 = vmatprep.subr.mxu0 0.0
      %550 = vmatpush1.msra.mxu0 0.0
      %551 = vmatprep.subr.mxu0 0.0
      %552 = vmatpush1.msra.mxu0 0.0
      %553 = vmatprep.subr.mxu0 0.0
      %554 = vmatpush1.msra.mxu0 0.0
      %555 = vmatprep.subr.mxu0 0.0
      %556 = vmatpush1.msra.mxu0 0.0
      %557 = vmatprep.subr.mxu0 0.0
      %558 = vmatpush1.msra.mxu0 0.0
      %559 = vmatprep.subr.mxu0 0.0
      %560 = vmatpush1.msra.mxu0 0.0
      %561 = vmatprep.subr.mxu0 0.0
      %562 = vmatpush1.msra.mxu0 0.0
      %563 = vmatprep.subr.mxu0 0.0
      %564 = vmatpush1.msra.mxu0 0.0
      %565 = vmatprep.subr.mxu0 0.0
      %566 = vmatpush1.msra.mxu0 0.0
      %567 = vmatprep.subr.mxu0 0.0
      %568 = vmatpush1.msra.mxu0 0.0
      %569 = vmatprep.subr.mxu0 0.0
      %570 = vmatpush1.msra.mxu0 0.0
      %571 = vmatprep.mubr.f32.mxu0 0.0
      %v572 = vand.u32 %v191, 4294901760
      %v573 = vsub.f32 %v191, %v572
      %v574 = vand.u32 %v573, 4294901760
      %575 = vmatmul.mubr.f32.gmra.mrb[0].mxu0 %v574
      %v576 = vpop.f32.mrb[0].mxu0
      %v577 = vadd.f32 %v481, %v576
      %v578 = vpop.f32.mrb[0].mxu0
      %579 = vmatprep.mubr.f32.mxu0 0.0
      %v580 = vand.u32 %v194, 4294901760
      %v581 = vsub.f32 %v194, %v580
      %v582 = vand.u32 %v581, 4294901760
      %583 = vmatmul.mubr.f32.gmra.mrb[0].mxu0 %v582
      %v584 = vpop.f32.mrb[0].mxu0
      %v585 = vadd.f32 %v488, %v584
      %v586 = vpop.f32.mrb[0].mxu0
      %587 = vmatprep.mubr.f32.mxu0 0.0
      %v588 = vand.u32 %v197, 4294901760
      %v589 = vsub.f32 %v197, %v588
      %v590 = vand.u32 %v589, 4294901760
      %591 = vmatmul.mubr.f32.gmra.mrb[0].mxu0 %v590
      %v592 = vpop.f32.mrb[0].mxu0
      %v593 = vadd.f32 %v495, %v592
      %v594 = vpop.f32.mrb[0].mxu0
      %595 = vmatprep.mubr.f32.mxu0 0.0
      %v596 = vand.u32 %v200, 4294901760
      %v597 = vsub.f32 %v200, %v596
      %v598 = vand.u32 %v597, 4294901760
      %599 = vmatmul.mubr.f32.gmra.mrb[0].mxu0 %v598
      %v600 = vpop.f32.mrb[0].mxu0
      %v601 = vadd.f32 %v502, %v600
      %v602 = vpop.f32.mrb[0].mxu0
      %603 = vdwg.mxu0
      %604 = vmatprep.subr.mxu0 0.0
      %v605 = vand.u32 %v187, 4294901760
      %v606 = vsub.f32 %v187, %v605
      %v607 = vand.u32 %v606, 4294901760
      %608 = vmatpush1.msra.mxu0 %v607
      %609 = vmatprep.subr.mxu0 0.0
      %v610 = vand.u32 %v188, 4294901760
      %v611 = vsub.f32 %v188, %v610
      %v612 = vand.u32 %v611, 4294901760
      %613 = vmatpush1.msra.mxu0 %v612
      %614 = vmatprep.subr.mxu0 0.0
      %615 = vmatpush1.msra.mxu0 0.0
      %616 = vmatprep.subr.mxu0 0.0
      %617 = vmatpush1.msra.mxu0 0.0
      %618 = vmatprep.subr.mxu0 0.0
      %619 = vmatpush1.msra.mxu0 0.0
      %620 = vmatprep.subr.mxu0 0.0
      %621 = vmatpush1.msra.mxu0 0.0
      %622 = vmatprep.subr.mxu0 0.0
      %623 = vmatpush1.msra.mxu0 0.0
      %624 = vmatprep.subr.mxu0 0.0
      %625 = vmatpush1.msra.mxu0 0.0
      %626 = vmatprep.subr.mxu0 0.0
      %627 = vmatpush1.msra.mxu0 0.0
      %628 = vmatprep.subr.mxu0 0.0
      %629 = vmatpush1.msra.mxu0 0.0
      %630 = vmatprep.subr.mxu0 0.0
      %631 = vmatpush1.msra.mxu0 0.0
      %632 = vmatprep.subr.mxu0 0.0
      %633 = vmatpush1.msra.mxu0 0.0
      %634 = vmatprep.subr.mxu0 0.0
      %635 = vmatpush1.msra.mxu0 0.0
      %636 = vmatprep.subr.mxu0 0.0
      %637 = vmatpush1.msra.mxu0 0.0
      %638 = vmatprep.subr.mxu0 0.0
      %639 = vmatpush1.msra.mxu0 0.0
      %640 = vmatprep.subr.mxu0 0.0
      %641 = vmatpush1.msra.mxu0 0.0
      %642 = vmatprep.subr.mxu0 0.0
      %643 = vmatpush1.msra.mxu0 0.0
      %644 = vmatprep.subr.mxu0 0.0
      %645 = vmatpush1.msra.mxu0 0.0
      %646 = vmatprep.subr.mxu0 0.0
      %647 = vmatpush1.msra.mxu0 0.0
      %648 = vmatprep.subr.mxu0 0.0
      %649 = vmatpush1.msra.mxu0 0.0
      %650 = vmatprep.subr.mxu0 0.0
      %651 = vmatpush1.msra.mxu0 0.0
      %652 = vmatprep.subr.mxu0 0.0
      %653 = vmatpush1.msra.mxu0 0.0
      %654 = vmatprep.subr.mxu0 0.0
      %655 = vmatpush1.msra.mxu0 0.0
      %656 = vmatprep.subr.mxu0 0.0
      %657 = vmatpush1.msra.mxu0 0.0
      %658 = vmatprep.subr.mxu0 0.0
      %659 = vmatpush1.msra.mxu0 0.0
      %660 = vmatprep.subr.mxu0 0.0
      %661 = vmatpush1.msra.mxu0 0.0
      %662 = vmatprep.subr.mxu0 0.0
      %663 = vmatpush1.msra.mxu0 0.0
      %664 = vmatprep.subr.mxu0 0.0
      %665 = vmatpush1.msra.mxu0 0.0
      %666 = vmatprep.subr.mxu0 0.0
      %667 = vmatpush1.msra.mxu0 0.0
      %668 = vmatprep.subr.mxu0 0.0
      %669 = vmatpush1.msra.mxu0 0.0
      %670 = vmatprep.subr.mxu0 0.0
      %671 = vmatpush1.msra.mxu0 0.0
      %672 = vmatprep.subr.mxu0 0.0
      %673 = vmatpush1.msra.mxu0 0.0
      %674 = vmatprep.mubr.f32.mxu0 0.0
      %v675 = vand.u32 %v191, 4294901760
      %676 = vmatmul.mubr.f32.gmra.mrb[0].mxu0 %v675
      %v677 = vpop.f32.mrb[0].mxu0
      %v678 = vadd.f32 %v577, %v677
      %v679 = vpop.f32.mrb[0].mxu0
      %680 = vmatprep.mubr.f32.mxu0 0.0
      %v681 = vand.u32 %v194, 4294901760
      %682 = vmatmul.mubr.f32.gmra.mrb[0].mxu0 %v681
      %v683 = vpop.f32.mrb[0].mxu0
      %v684 = vadd.f32 %v585, %v683
      %v685 = vpop.f32.mrb[0].mxu0
      %686 = vmatprep.mubr.f32.mxu0 0.0
      %v687 = vand.u32 %v197, 4294901760
      %688 = vmatmul.mubr.f32.gmra.mrb[0].mxu0 %v687
      %v689 = vpop.f32.mrb[0].mxu0
      %v690 = vadd.f32 %v593, %v689
      %v691 = vpop.f32.mrb[0].mxu0
      %692 = vmatprep.mubr.f32.mxu0 0.0
      %v693 = vand.u32 %v200, 4294901760
      %694 = vmatmul.mubr.f32.gmra.mrb[0].mxu0 %v693
      %v695 = vpop.f32.mrb[0].mxu0
      %v696 = vadd.f32 %v601, %v695
      %v697 = vpop.f32.mrb[0].mxu0
      %698 = vdwg.mxu0
      %699 = vmatprep.subr.mxu0 0.0
      %v700 = vand.u32 %v187, 4294901760
      %701 = vmatpush1.msra.mxu0 %v700
      %702 = vmatprep.subr.mxu0 0.0
      %v703 = vand.u32 %v188, 4294901760
      %704 = vmatpush1.msra.mxu0 %v703
      %705 = vmatprep.subr.mxu0 0.0
      %706 = vmatpush1.msra.mxu0 0.0
      %707 = vmatprep.subr.mxu0 0.0
      %708 = vmatpush1.msra.mxu0 0.0
      %709 = vmatprep.subr.mxu0 0.0
      %710 = vmatpush1.msra.mxu0 0.0
      %711 = vmatprep.subr.mxu0 0.0
      %712 = vmatpush1.msra.mxu0 0.0
      %713 = vmatprep.subr.mxu0 0.0
      %714 = vmatpush1.msra.mxu0 0.0
      %715 = vmatprep.subr.mxu0 0.0
      %716 = vmatpush1.msra.mxu0 0.0
      %717 = vmatprep.subr.mxu0 0.0
      %718 = vmatpush1.msra.mxu0 0.0
      %719 = vmatprep.subr.mxu0 0.0
      %720 = vmatpush1.msra.mxu0 0.0
      %721 = vmatprep.subr.mxu0 0.0
      %722 = vmatpush1.msra.mxu0 0.0
      %723 = vmatprep.subr.mxu0 0.0
      %724 = vmatpush1.msra.mxu0 0.0
      %725 = vmatprep.subr.mxu0 0.0
      %726 = vmatpush1.msra.mxu0 0.0
      %727 = vmatprep.subr.mxu0 0.0
      %728 = vmatpush1.msra.mxu0 0.0
      %729 = vmatprep.subr.mxu0 0.0
      %730 = vmatpush1.msra.mxu0 0.0
      %731 = vmatprep.subr.mxu0 0.0
      %732 = vmatpush1.msra.mxu0 0.0
      %733 = vmatprep.subr.mxu0 0.0
      %734 = vmatpush1.msra.mxu0 0.0
      %735 = vmatprep.subr.mxu0 0.0
      %736 = vmatpush1.msra.mxu0 0.0
      %737 = vmatprep.subr.mxu0 0.0
      %738 = vmatpush1.msra.mxu0 0.0
      %739 = vmatprep.subr.mxu0 0.0
      %740 = vmatpush1.msra.mxu0 0.0
      %741 = vmatprep.subr.mxu0 0.0
      %742 = vmatpush1.msra.mxu0 0.0
      %743 = vmatprep.subr.mxu0 0.0
      %744 = vmatpush1.msra.mxu0 0.0
      %745 = vmatprep.subr.mxu0 0.0
      %746 = vmatpush1.msra.mxu0 0.0
      %747 = vmatprep.subr.mxu0 0.0
      %748 = vmatpush1.msra.mxu0 0.0
      %749 = vmatprep.subr.mxu0 0.0
      %750 = vmatpush1.msra.mxu0 0.0
      %751 = vmatprep.subr.mxu0 0.0
      %752 = vmatpush1.msra.mxu0 0.0
      %753 = vmatprep.subr.mxu0 0.0
      %754 = vmatpush1.msra.mxu0 0.0
      %755 = vmatprep.subr.mxu0 0.0
      %756 = vmatpush1.msra.mxu0 0.0
      %757 = vmatprep.subr.mxu0 0.0
      %758 = vmatpush1.msra.mxu0 0.0
      %759 = vmatprep.subr.mxu0 0.0
      %760 = vmatpush1.msra.mxu0 0.0
      %761 = vmatprep.subr.mxu0 0.0
      %762 = vmatpush1.msra.mxu0 0.0
      %763 = vmatprep.subr.mxu0 0.0
      %764 = vmatpush1.msra.mxu0 0.0
      %765 = vmatprep.mubr.f32.mxu0 0.0
      %v766 = vand.u32 %v191, 4294901760
      %767 = vmatmul.mubr.f32.gmra.mrb[0].mxu0 %v766
      %v768 = vpop.f32.mrb[0].mxu0
      %v769 = vadd.f32 %v678, %v768
      %v770 = vpop.f32.mrb[0].mxu0
      %771 = vmatprep.mubr.f32.mxu0 0.0
      %v772 = vand.u32 %v194, 4294901760
      %773 = vmatmul.mubr.f32.gmra.mrb[0].mxu0 %v772
      %v774 = vpop.f32.mrb[0].mxu0
      %v775 = vadd.f32 %v684, %v774
      %v776 = vpop.f32.mrb[0].mxu0
      %777 = vmatprep.mubr.f32.mxu0 0.0
      %v778 = vand.u32 %v197, 4294901760
      %779 = vmatmul.mubr.f32.gmra.mrb[0].mxu0 %v778
      %v780 = vpop.f32.mrb[0].mxu0
      %v781 = vadd.f32 %v690, %v780
      %v782 = vpop.f32.mrb[0].mxu0
      %783 = vmatprep.mubr.f32.mxu0 0.0
      %v784 = vand.u32 %v200, 4294901760
      %785 = vmatmul.mubr.f32.gmra.mrb[0].mxu0 %v784
      %v786 = vpop.f32.mrb[0].mxu0
      %v787 = vadd.f32 %v696, %v786
      %v788 = vpop.f32.mrb[0].mxu0
      %789 = vdwg.mxu0
      %790 = vrot.lane.b32.xlu0 %v183, 112
      %v791 = vpop.permute.xlu0 %790
      %792 = vrot.lane.b32.xlu0 %v184, 112
      %v793 = vpop.permute.xlu0 %792
      %794 = vrot.lane.b32.xlu0 %v185, 112
      %v795 = vpop.permute.xlu0 %794
      %796 = vrot.lane.b32.xlu0 %v186, 112
      %v797 = vpop.permute.xlu0 %796
      %v798 = vsel %vm189, %v791, 0
      %v800 = vsel %vm189, %v793, 0
      %v802 = vsel %vm189, %v795, 0
      %v804 = vsel %vm189, %v797, 0
      %806 = vmatprep.subr.mxu0 0.0
      %v807 = vand.u32 %v187, 4294901760
      %808 = vmatpush1.msra.mxu0 %v807
      %809 = vmatprep.subr.mxu0 0.0
      %v810 = vand.u32 %v188, 4294901760
      %811 = vmatpush1.msra.mxu0 %v810
      %812 = vmatprep.subr.mxu0 0.0
      %813 = vmatpush1.msra.mxu0 0.0
      %814 = vmatprep.subr.mxu0 0.0
      %815 = vmatpush1.msra.mxu0 0.0
      %816 = vmatprep.subr.mxu0 0.0
      %817 = vmatpush1.msra.mxu0 0.0
      %818 = vmatprep.subr.mxu0 0.0
      %819 = vmatpush1.msra.mxu0 0.0
      %820 = vmatprep.subr.mxu0 0.0
      %821 = vmatpush1.msra.mxu0 0.0
      %822 = vmatprep.subr.mxu0 0.0
      %823 = vmatpush1.msra.mxu0 0.0
      %824 = vmatprep.subr.mxu0 0.0
      %825 = vmatpush1.msra.mxu0 0.0
      %826 = vmatprep.subr.mxu0 0.0
      %827 = vmatpush1.msra.mxu0 0.0
      %828 = vmatprep.subr.mxu0 0.0
      %829 = vmatpush1.msra.mxu0 0.0
      %830 = vmatprep.subr.mxu0 0.0
      %831 = vmatpush1.msra.mxu0 0.0
      %832 = vmatprep.subr.mxu0 0.0
      %833 = vmatpush1.msra.mxu0 0.0
      %834 = vmatprep.subr.mxu0 0.0
      %835 = vmatpush1.msra.mxu0 0.0
      %836 = vmatprep.subr.mxu0 0.0
      %837 = vmatpush1.msra.mxu0 0.0
      %838 = vmatprep.subr.mxu0 0.0
      %839 = vmatpush1.msra.mxu0 0.0
      %840 = vmatprep.subr.mxu0 0.0
      %841 = vmatpush1.msra.mxu0 0.0
      %842 = vmatprep.subr.mxu0 0.0
      %843 = vmatpush1.msra.mxu0 0.0
      %844 = vmatprep.subr.mxu0 0.0
      %845 = vmatpush1.msra.mxu0 0.0
      %846 = vmatprep.subr.mxu0 0.0
      %847 = vmatpush1.msra.mxu0 0.0
      %848 = vmatprep.subr.mxu0 0.0
      %849 = vmatpush1.msra.mxu0 0.0
      %850 = vmatprep.subr.mxu0 0.0
      %851 = vmatpush1.msra.mxu0 0.0
      %852 = vmatprep.subr.mxu0 0.0
      %853 = vmatpush1.msra.mxu0 0.0
      %854 = vmatprep.subr.mxu0 0.0
      %855 = vmatpush1.msra.mxu0 0.0
      %856 = vmatprep.subr.mxu0 0.0
      %857 = vmatpush1.msra.mxu0 0.0
      %858 = vmatprep.subr.mxu0 0.0
      %859 = vmatpush1.msra.mxu0 0.0
      %860 = vmatprep.subr.mxu0 0.0
      %861 = vmatpush1.msra.mxu0 0.0
      %862 = vmatprep.subr.mxu0 0.0
      %863 = vmatpush1.msra.mxu0 0.0
      %864 = vmatprep.subr.mxu0 0.0
      %865 = vmatpush1.msra.mxu0 0.0
      %866 = vmatprep.subr.mxu0 0.0
      %867 = vmatpush1.msra.mxu0 0.0
      %868 = vmatprep.subr.mxu0 0.0
      %869 = vmatpush1.msra.mxu0 0.0
      %870 = vmatprep.subr.mxu0 0.0
      %871 = vmatpush1.msra.mxu0 0.0
      %872 = vmatprep.mubr.f32.mxu0 0.0
      %v873 = vand.u32 %v798, 4294901760
      %v874 = vsub.f32 %v798, %v873
      %v875 = vand.u32 %v874, 4294901760
      %v876 = vsub.f32 %v874, %v875
      %v877 = vand.u32 %v876, 4294901760
      %878 = vmatmul.mubr.f32.gmra.mrb[0].mxu0 %v877
      %v879 = vpop.f32.mrb[0].mxu0
      %v880 = vadd.f32 0.0, %v879
      %v881 = vpop.f32.mrb[0].mxu0
      %882 = vmatprep.mubr.f32.mxu0 0.0
      %v883 = vand.u32 %v800, 4294901760
      %v884 = vsub.f32 %v800, %v883
      %v885 = vand.u32 %v884, 4294901760
      %v886 = vsub.f32 %v884, %v885
      %v887 = vand.u32 %v886, 4294901760
      %888 = vmatmul.mubr.f32.gmra.mrb[0].mxu0 %v887
      %v889 = vpop.f32.mrb[0].mxu0
      %v890 = vadd.f32 0.0, %v889
      %v891 = vpop.f32.mrb[0].mxu0
      %892 = vmatprep.mubr.f32.mxu0 0.0
      %v893 = vand.u32 %v802, 4294901760
      %v894 = vsub.f32 %v802, %v893
      %v895 = vand.u32 %v894, 4294901760
      %v896 = vsub.f32 %v894, %v895
      %v897 = vand.u32 %v896, 4294901760
      %898 = vmatmul.mubr.f32.gmra.mrb[0].mxu0 %v897
      %v899 = vpop.f32.mrb[0].mxu0
      %v900 = vadd.f32 0.0, %v899
      %v901 = vpop.f32.mrb[0].mxu0
      %902 = vmatprep.mubr.f32.mxu0 0.0
      %v903 = vand.u32 %v804, 4294901760
      %v904 = vsub.f32 %v804, %v903
      %v905 = vand.u32 %v904, 4294901760
      %v906 = vsub.f32 %v904, %v905
      %v907 = vand.u32 %v906, 4294901760
      %908 = vmatmul.mubr.f32.gmra.mrb[0].mxu0 %v907
      %v909 = vpop.f32.mrb[0].mxu0
      %v910 = vadd.f32 0.0, %v909
      %v911 = vpop.f32.mrb[0].mxu0
      %912 = vdwg.mxu0
      %913 = vmatprep.subr.mxu0 0.0
      %v914 = vand.u32 %v187, 4294901760
      %v915 = vsub.f32 %v187, %v914
      %v916 = vand.u32 %v915, 4294901760
      %v917 = vsub.f32 %v915, %v916
      %v918 = vand.u32 %v917, 4294901760
      %919 = vmatpush1.msra.mxu0 %v918
      %920 = vmatprep.subr.mxu0 0.0
      %v921 = vand.u32 %v188, 4294901760
      %v922 = vsub.f32 %v188, %v921
      %v923 = vand.u32 %v922, 4294901760
      %v924 = vsub.f32 %v922, %v923
      %v925 = vand.u32 %v924, 4294901760
      %926 = vmatpush1.msra.mxu0 %v925
      %927 = vmatprep.subr.mxu0 0.0
      %928 = vmatpush1.msra.mxu0 0.0
      %929 = vmatprep.subr.mxu0 0.0
      %930 = vmatpush1.msra.mxu0 0.0
      %931 = vmatprep.subr.mxu0 0.0
      %932 = vmatpush1.msra.mxu0 0.0
      %933 = vmatprep.subr.mxu0 0.0
      %934 = vmatpush1.msra.mxu0 0.0
      %935 = vmatprep.subr.mxu0 0.0
      %936 = vmatpush1.msra.mxu0 0.0
      %937 = vmatprep.subr.mxu0 0.0
      %938 = vmatpush1.msra.mxu0 0.0
      %939 = vmatprep.subr.mxu0 0.0
      %940 = vmatpush1.msra.mxu0 0.0
      %941 = vmatprep.subr.mxu0 0.0
      %942 = vmatpush1.msra.mxu0 0.0
      %943 = vmatprep.subr.mxu0 0.0
      %944 = vmatpush1.msra.mxu0 0.0
      %945 = vmatprep.subr.mxu0 0.0
      %946 = vmatpush1.msra.mxu0 0.0
      %947 = vmatprep.subr.mxu0 0.0
      %948 = vmatpush1.msra.mxu0 0.0
      %949 = vmatprep.subr.mxu0 0.0
      %950 = vmatpush1.msra.mxu0 0.0
      %951 = vmatprep.subr.mxu0 0.0
      %952 = vmatpush1.msra.mxu0 0.0
      %953 = vmatprep.subr.mxu0 0.0
      %954 = vmatpush1.msra.mxu0 0.0
      %955 = vmatprep.subr.mxu0 0.0
      %956 = vmatpush1.msra.mxu0 0.0
      %957 = vmatprep.subr.mxu0 0.0
      %958 = vmatpush1.msra.mxu0 0.0
      %959 = vmatprep.subr.mxu0 0.0
      %960 = vmatpush1.msra.mxu0 0.0
      %961 = vmatprep.subr.mxu0 0.0
      %962 = vmatpush1.msra.mxu0 0.0
      %963 = vmatprep.subr.mxu0 0.0
      %964 = vmatpush1.msra.mxu0 0.0
      %965 = vmatprep.subr.mxu0 0.0
      %966 = vmatpush1.msra.mxu0 0.0
      %967 = vmatprep.subr.mxu0 0.0
      %968 = vmatpush1.msra.mxu0 0.0
      %969 = vmatprep.subr.mxu0 0.0
      %970 = vmatpush1.msra.mxu0 0.0
      %971 = vmatprep.subr.mxu0 0.0
      %972 = vmatpush1.msra.mxu0 0.0
      %973 = vmatprep.subr.mxu0 0.0
      %974 = vmatpush1.msra.mxu0 0.0
      %975 = vmatprep.subr.mxu0 0.0
      %976 = vmatpush1.msra.mxu0 0.0
      %977 = vmatprep.subr.mxu0 0.0
      %978 = vmatpush1.msra.mxu0 0.0
      %979 = vmatprep.subr.mxu0 0.0
      %980 = vmatpush1.msra.mxu0 0.0
      %981 = vmatprep.subr.mxu0 0.0
      %982 = vmatpush1.msra.mxu0 0.0
      %983 = vmatprep.subr.mxu0 0.0
      %984 = vmatpush1.msra.mxu0 0.0
      %985 = vmatprep.subr.mxu0 0.0
      %986 = vmatpush1.msra.mxu0 0.0
      %987 = vmatprep.mubr.f32.mxu0 0.0
      %v988 = vand.u32 %v798, 4294901760
      %989 = vmatmul.mubr.f32.gmra.mrb[0].mxu0 %v988
      %v990 = vpop.f32.mrb[0].mxu0
      %v991 = vadd.f32 %v880, %v990
      %v992 = vpop.f32.mrb[0].mxu0
      %993 = vmatprep.mubr.f32.mxu0 0.0
      %v994 = vand.u32 %v800, 4294901760
      %995 = vmatmul.mubr.f32.gmra.mrb[0].mxu0 %v994
      %v996 = vpop.f32.mrb[0].mxu0
      %v997 = vadd.f32 %v890, %v996
      %v998 = vpop.f32.mrb[0].mxu0
      %999 = vmatprep.mubr.f32.mxu0 0.0
      %v1000 = vand.u32 %v802, 4294901760
      %1001 = vmatmul.mubr.f32.gmra.mrb[0].mxu0 %v1000
      %v1002 = vpop.f32.mrb[0].mxu0
      %v1003 = vadd.f32 %v900, %v1002
      %v1004 = vpop.f32.mrb[0].mxu0
      %1005 = vmatprep.mubr.f32.mxu0 0.0
      %v1006 = vand.u32 %v804, 4294901760
      %1007 = vmatmul.mubr.f32.gmra.mrb[0].mxu0 %v1006
      %v1008 = vpop.f32.mrb[0].mxu0
      %v1009 = vadd.f32 %v910, %v1008
      %v1010 = vpop.f32.mrb[0].mxu0
      %1011 = vdwg.mxu0
      %1012 = vmatprep.subr.mxu0 0.0
      %v1013 = vand.u32 %v187, 4294901760
      %v1014 = vsub.f32 %v187, %v1013
      %1015 = vmatpush1.msra.mxu0 %v1014
      %1016 = vmatprep.subr.mxu0 0.0
      %v1017 = vand.u32 %v188, 4294901760
      %v1018 = vsub.f32 %v188, %v1017
      %1019 = vmatpush1.msra.mxu0 %v1018
      %1020 = vmatprep.subr.mxu0 0.0
      %1021 = vmatpush1.msra.mxu0 0.0
      %1022 = vmatprep.subr.mxu0 0.0
      %1023 = vmatpush1.msra.mxu0 0.0
      %1024 = vmatprep.subr.mxu0 0.0
      %1025 = vmatpush1.msra.mxu0 0.0
      %1026 = vmatprep.subr.mxu0 0.0
      %1027 = vmatpush1.msra.mxu0 0.0
      %1028 = vmatprep.subr.mxu0 0.0
      %1029 = vmatpush1.msra.mxu0 0.0
      %1030 = vmatprep.subr.mxu0 0.0
      %1031 = vmatpush1.msra.mxu0 0.0
      %1032 = vmatprep.subr.mxu0 0.0
      %1033 = vmatpush1.msra.mxu0 0.0
      %1034 = vmatprep.subr.mxu0 0.0
      %1035 = vmatpush1.msra.mxu0 0.0
      %1036 = vmatprep.subr.mxu0 0.0
      %1037 = vmatpush1.msra.mxu0 0.0
      %1038 = vmatprep.subr.mxu0 0.0
      %1039 = vmatpush1.msra.mxu0 0.0
      %1040 = vmatprep.subr.mxu0 0.0
      %1041 = vmatpush1.msra.mxu0 0.0
      %1042 = vmatprep.subr.mxu0 0.0
      %1043 = vmatpush1.msra.mxu0 0.0
      %1044 = vmatprep.subr.mxu0 0.0
      %1045 = vmatpush1.msra.mxu0 0.0
      %1046 = vmatprep.subr.mxu0 0.0
      %1047 = vmatpush1.msra.mxu0 0.0
      %1048 = vmatprep.subr.mxu0 0.0
      %1049 = vmatpush1.msra.mxu0 0.0
      %1050 = vmatprep.subr.mxu0 0.0
      %1051 = vmatpush1.msra.mxu0 0.0
      %1052 = vmatprep.subr.mxu0 0.0
      %1053 = vmatpush1.msra.mxu0 0.0
      %1054 = vmatprep.subr.mxu0 0.0
      %1055 = vmatpush1.msra.mxu0 0.0
      %1056 = vmatprep.subr.mxu0 0.0
      %1057 = vmatpush1.msra.mxu0 0.0
      %1058 = vmatprep.subr.mxu0 0.0
      %1059 = vmatpush1.msra.mxu0 0.0
      %1060 = vmatprep.subr.mxu0 0.0
      %1061 = vmatpush1.msra.mxu0 0.0
      %1062 = vmatprep.subr.mxu0 0.0
      %1063 = vmatpush1.msra.mxu0 0.0
      %1064 = vmatprep.subr.mxu0 0.0
      %1065 = vmatpush1.msra.mxu0 0.0
      %1066 = vmatprep.subr.mxu0 0.0
      %1067 = vmatpush1.msra.mxu0 0.0
      %1068 = vmatprep.subr.mxu0 0.0
      %1069 = vmatpush1.msra.mxu0 0.0
      %1070 = vmatprep.subr.mxu0 0.0
      %1071 = vmatpush1.msra.mxu0 0.0
      %1072 = vmatprep.subr.mxu0 0.0
      %1073 = vmatpush1.msra.mxu0 0.0
      %1074 = vmatprep.subr.mxu0 0.0
      %1075 = vmatpush1.msra.mxu0 0.0
      %1076 = vmatprep.subr.mxu0 0.0
      %1077 = vmatpush1.msra.mxu0 0.0
      %1078 = vmatprep.subr.mxu0 0.0
      %1079 = vmatpush1.msra.mxu0 0.0
      %1080 = vmatprep.mubr.f32.mxu0 0.0
      %v1081 = vand.u32 %v798, 4294901760
      %v1082 = vsub.f32 %v798, %v1081
      %1083 = vmatmul.mubr.f32.gmra.mrb[0].mxu0 %v1082
      %v1084 = vpop.f32.mrb[0].mxu0
      %v1085 = vadd.f32 %v991, %v1084
      %v1086 = vpop.f32.mrb[0].mxu0
      %1087 = vmatprep.mubr.f32.mxu0 0.0
      %v1088 = vand.u32 %v800, 4294901760
      %v1089 = vsub.f32 %v800, %v1088
      %1090 = vmatmul.mubr.f32.gmra.mrb[0].mxu0 %v1089
      %v1091 = vpop.f32.mrb[0].mxu0
      %v1092 = vadd.f32 %v997, %v1091
      %v1093 = vpop.f32.mrb[0].mxu0
      %1094 = vmatprep.mubr.f32.mxu0 0.0
      %v1095 = vand.u32 %v802, 4294901760
      %v1096 = vsub.f32 %v802, %v1095
      %1097 = vmatmul.mubr.f32.gmra.mrb[0].mxu0 %v1096
      %v1098 = vpop.f32.mrb[0].mxu0
      %v1099 = vadd.f32 %v1003, %v1098
      %v1100 = vpop.f32.mrb[0].mxu0
      %1101 = vmatprep.mubr.f32.mxu0 0.0
      %v1102 = vand.u32 %v804, 4294901760
      %v1103 = vsub.f32 %v804, %v1102
      %1104 = vmatmul.mubr.f32.gmra.mrb[0].mxu0 %v1103
      %v1105 = vpop.f32.mrb[0].mxu0
      %v1106 = vadd.f32 %v1009, %v1105
      %v1107 = vpop.f32.mrb[0].mxu0
      %1108 = vdwg.mxu0
      %1109 = vmatprep.subr.mxu0 0.0
      %v1110 = vand.u32 %v187, 4294901760
      %1111 = vmatpush1.msra.mxu0 %v1110
      %1112 = vmatprep.subr.mxu0 0.0
      %v1113 = vand.u32 %v188, 4294901760
      %1114 = vmatpush1.msra.mxu0 %v1113
      %1115 = vmatprep.subr.mxu0 0.0
      %1116 = vmatpush1.msra.mxu0 0.0
      %1117 = vmatprep.subr.mxu0 0.0
      %1118 = vmatpush1.msra.mxu0 0.0
      %1119 = vmatprep.subr.mxu0 0.0
      %1120 = vmatpush1.msra.mxu0 0.0
      %1121 = vmatprep.subr.mxu0 0.0
      %1122 = vmatpush1.msra.mxu0 0.0
      %1123 = vmatprep.subr.mxu0 0.0
      %1124 = vmatpush1.msra.mxu0 0.0
      %1125 = vmatprep.subr.mxu0 0.0
      %1126 = vmatpush1.msra.mxu0 0.0
      %1127 = vmatprep.subr.mxu0 0.0
      %1128 = vmatpush1.msra.mxu0 0.0
      %1129 = vmatprep.subr.mxu0 0.0
      %1130 = vmatpush1.msra.mxu0 0.0
      %1131 = vmatprep.subr.mxu0 0.0
      %1132 = vmatpush1.msra.mxu0 0.0
      %1133 = vmatprep.subr.mxu0 0.0
      %1134 = vmatpush1.msra.mxu0 0.0
      %1135 = vmatprep.subr.mxu0 0.0
      %1136 = vmatpush1.msra.mxu0 0.0
      %1137 = vmatprep.subr.mxu0 0.0
      %1138 = vmatpush1.msra.mxu0 0.0
      %1139 = vmatprep.subr.mxu0 0.0
      %1140 = vmatpush1.msra.mxu0 0.0
      %1141 = vmatprep.subr.mxu0 0.0
      %1142 = vmatpush1.msra.mxu0 0.0
      %1143 = vmatprep.subr.mxu0 0.0
      %1144 = vmatpush1.msra.mxu0 0.0
      %1145 = vmatprep.subr.mxu0 0.0
      %1146 = vmatpush1.msra.mxu0 0.0
      %1147 = vmatprep.subr.mxu0 0.0
      %1148 = vmatpush1.msra.mxu0 0.0
      %1149 = vmatprep.subr.mxu0 0.0
      %1150 = vmatpush1.msra.mxu0 0.0
      %1151 = vmatprep.subr.mxu0 0.0
      %1152 = vmatpush1.msra.mxu0 0.0
      %1153 = vmatprep.subr.mxu0 0.0
      %1154 = vmatpush1.msra.mxu0 0.0
      %1155 = vmatprep.subr.mxu0 0.0
      %1156 = vmatpush1.msra.mxu0 0.0
      %1157 = vmatprep.subr.mxu0 0.0
      %1158 = vmatpush1.msra.mxu0 0.0
      %1159 = vmatprep.subr.mxu0 0.0
      %1160 = vmatpush1.msra.mxu0 0.0
      %1161 = vmatprep.subr.mxu0 0.0
      %1162 = vmatpush1.msra.mxu0 0.0
      %1163 = vmatprep.subr.mxu0 0.0
      %1164 = vmatpush1.msra.mxu0 0.0
      %1165 = vmatprep.subr.mxu0 0.0
      %1166 = vmatpush1.msra.mxu0 0.0
      %1167 = vmatprep.subr.mxu0 0.0
      %1168 = vmatpush1.msra.mxu0 0.0
      %1169 = vmatprep.subr.mxu0 0.0
      %1170 = vmatpush1.msra.mxu0 0.0
      %1171 = vmatprep.subr.mxu0 0.0
      %1172 = vmatpush1.msra.mxu0 0.0
      %1173 = vmatprep.subr.mxu0 0.0
      %1174 = vmatpush1.msra.mxu0 0.0
      %1175 = vmatprep.mubr.f32.mxu0 0.0
      %v1176 = vand.u32 %v798, 4294901760
      %v1177 = vsub.f32 %v798, %v1176
      %v1178 = vand.u32 %v1177, 4294901760
      %1179 = vmatmul.mubr.f32.gmra.mrb[0].mxu0 %v1178
      %v1180 = vpop.f32.mrb[0].mxu0
      %v1181 = vadd.f32 %v1085, %v1180
      %v1182 = vpop.f32.mrb[0].mxu0
      %1183 = vmatprep.mubr.f32.mxu0 0.0
      %v1184 = vand.u32 %v800, 4294901760
      %v1185 = vsub.f32 %v800, %v1184
      %v1186 = vand.u32 %v1185, 4294901760
      %1187 = vmatmul.mubr.f32.gmra.mrb[0].mxu0 %v1186
      %v1188 = vpop.f32.mrb[0].mxu0
      %v1189 = vadd.f32 %v1092, %v1188
      %v1190 = vpop.f32.mrb[0].mxu0
      %1191 = vmatprep.mubr.f32.mxu0 0.0
      %v1192 = vand.u32 %v802, 4294901760
      %v1193 = vsub.f32 %v802, %v1192
      %v1194 = vand.u32 %v1193, 4294901760
      %1195 = vmatmul.mubr.f32.gmra.mrb[0].mxu0 %v1194
      %v1196 = vpop.f32.mrb[0].mxu0
      %v1197 = vadd.f32 %v1099, %v1196
      %v1198 = vpop.f32.mrb[0].mxu0
      %1199 = vmatprep.mubr.f32.mxu0 0.0
      %v1200 = vand.u32 %v804, 4294901760
      %v1201 = vsub.f32 %v804, %v1200
      %v1202 = vand.u32 %v1201, 4294901760
      %1203 = vmatmul.mubr.f32.gmra.mrb[0].mxu0 %v1202
      %v1204 = vpop.f32.mrb[0].mxu0
      %v1205 = vadd.f32 %v1106, %v1204
      %v1206 = vpop.f32.mrb[0].mxu0
      %1207 = vdwg.mxu0
      %1208 = vmatprep.subr.mxu0 0.0
      %v1209 = vand.u32 %v187, 4294901760
      %v1210 = vsub.f32 %v187, %v1209
      %v1211 = vand.u32 %v1210, 4294901760
      %1212 = vmatpush1.msra.mxu0 %v1211
      %1213 = vmatprep.subr.mxu0 0.0
      %v1214 = vand.u32 %v188, 4294901760
      %v1215 = vsub.f32 %v188, %v1214
      %v1216 = vand.u32 %v1215, 4294901760
      %1217 = vmatpush1.msra.mxu0 %v1216
      %1218 = vmatprep.subr.mxu0 0.0
      %1219 = vmatpush1.msra.mxu0 0.0
      %1220 = vmatprep.subr.mxu0 0.0
      %1221 = vmatpush1.msra.mxu0 0.0
      %1222 = vmatprep.subr.mxu0 0.0
      %1223 = vmatpush1.msra.mxu0 0.0
      %1224 = vmatprep.subr.mxu0 0.0
      %1225 = vmatpush1.msra.mxu0 0.0
      %1226 = vmatprep.subr.mxu0 0.0
      %1227 = vmatpush1.msra.mxu0 0.0
      %1228 = vmatprep.subr.mxu0 0.0
      %1229 = vmatpush1.msra.mxu0 0.0
      %1230 = vmatprep.subr.mxu0 0.0
      %1231 = vmatpush1.msra.mxu0 0.0
      %1232 = vmatprep.subr.mxu0 0.0
      %1233 = vmatpush1.msra.mxu0 0.0
      %1234 = vmatprep.subr.mxu0 0.0
      %1235 = vmatpush1.msra.mxu0 0.0
      %1236 = vmatprep.subr.mxu0 0.0
      %1237 = vmatpush1.msra.mxu0 0.0
      %1238 = vmatprep.subr.mxu0 0.0
      %1239 = vmatpush1.msra.mxu0 0.0
      %1240 = vmatprep.subr.mxu0 0.0
      %1241 = vmatpush1.msra.mxu0 0.0
      %1242 = vmatprep.subr.mxu0 0.0
      %1243 = vmatpush1.msra.mxu0 0.0
      %1244 = vmatprep.subr.mxu0 0.0
      %1245 = vmatpush1.msra.mxu0 0.0
      %1246 = vmatprep.subr.mxu0 0.0
      %1247 = vmatpush1.msra.mxu0 0.0
      %1248 = vmatprep.subr.mxu0 0.0
      %1249 = vmatpush1.msra.mxu0 0.0
      %1250 = vmatprep.subr.mxu0 0.0
      %1251 = vmatpush1.msra.mxu0 0.0
      %1252 = vmatprep.subr.mxu0 0.0
      %1253 = vmatpush1.msra.mxu0 0.0
      %1254 = vmatprep.subr.mxu0 0.0
      %1255 = vmatpush1.msra.mxu0 0.0
      %1256 = vmatprep.subr.mxu0 0.0
      %1257 = vmatpush1.msra.mxu0 0.0
      %1258 = vmatprep.subr.mxu0 0.0
      %1259 = vmatpush1.msra.mxu0 0.0
      %1260 = vmatprep.subr.mxu0 0.0
      %1261 = vmatpush1.msra.mxu0 0.0
      %1262 = vmatprep.subr.mxu0 0.0
      %1263 = vmatpush1.msra.mxu0 0.0
      %1264 = vmatprep.subr.mxu0 0.0
      %1265 = vmatpush1.msra.mxu0 0.0
      %1266 = vmatprep.subr.mxu0 0.0
      %1267 = vmatpush1.msra.mxu0 0.0
      %1268 = vmatprep.subr.mxu0 0.0
      %1269 = vmatpush1.msra.mxu0 0.0
      %1270 = vmatprep.subr.mxu0 0.0
      %1271 = vmatpush1.msra.mxu0 0.0
      %1272 = vmatprep.subr.mxu0 0.0
      %1273 = vmatpush1.msra.mxu0 0.0
      %1274 = vmatprep.subr.mxu0 0.0
      %1275 = vmatpush1.msra.mxu0 0.0
      %1276 = vmatprep.subr.mxu0 0.0
      %1277 = vmatpush1.msra.mxu0 0.0
      %1278 = vmatprep.mubr.f32.mxu0 0.0
      %v1279 = vand.u32 %v798, 4294901760
      %1280 = vmatmul.mubr.f32.gmra.mrb[0].mxu0 %v1279
      %v1281 = vpop.f32.mrb[0].mxu0
      %v1282 = vadd.f32 %v1181, %v1281
      %v1283 = vpop.f32.mrb[0].mxu0
      %1284 = vmatprep.mubr.f32.mxu0 0.0
      %v1285 = vand.u32 %v800, 4294901760
      %1286 = vmatmul.mubr.f32.gmra.mrb[0].mxu0 %v1285
      %v1287 = vpop.f32.mrb[0].mxu0
      %v1288 = vadd.f32 %v1189, %v1287
      %v1289 = vpop.f32.mrb[0].mxu0
      %1290 = vmatprep.mubr.f32.mxu0 0.0
      %v1291 = vand.u32 %v802, 4294901760
      %1292 = vmatmul.mubr.f32.gmra.mrb[0].mxu0 %v1291
      %v1293 = vpop.f32.mrb[0].mxu0
      %v1294 = vadd.f32 %v1197, %v1293
      %v1295 = vpop.f32.mrb[0].mxu0
      %1296 = vmatprep.mubr.f32.mxu0 0.0
      %v1297 = vand.u32 %v804, 4294901760
      %1298 = vmatmul.mubr.f32.gmra.mrb[0].mxu0 %v1297
      %v1299 = vpop.f32.mrb[0].mxu0
      %v1300 = vadd.f32 %v1205, %v1299
      %v1301 = vpop.f32.mrb[0].mxu0
      %1302 = vdwg.mxu0
      %1303 = vmatprep.subr.mxu0 0.0
      %v1304 = vand.u32 %v187, 4294901760
      %1305 = vmatpush1.msra.mxu0 %v1304
      %1306 = vmatprep.subr.mxu0 0.0
      %v1307 = vand.u32 %v188, 4294901760
      %1308 = vmatpush1.msra.mxu0 %v1307
      %1309 = vmatprep.subr.mxu0 0.0
      %1310 = vmatpush1.msra.mxu0 0.0
      %1311 = vmatprep.subr.mxu0 0.0
      %1312 = vmatpush1.msra.mxu0 0.0
      %1313 = vmatprep.subr.mxu0 0.0
      %1314 = vmatpush1.msra.mxu0 0.0
      %1315 = vmatprep.subr.mxu0 0.0
      %1316 = vmatpush1.msra.mxu0 0.0
      %1317 = vmatprep.subr.mxu0 0.0
      %1318 = vmatpush1.msra.mxu0 0.0
      %1319 = vmatprep.subr.mxu0 0.0
      %1320 = vmatpush1.msra.mxu0 0.0
      %1321 = vmatprep.subr.mxu0 0.0
      %1322 = vmatpush1.msra.mxu0 0.0
      %1323 = vmatprep.subr.mxu0 0.0
      %1324 = vmatpush1.msra.mxu0 0.0
      %1325 = vmatprep.subr.mxu0 0.0
      %1326 = vmatpush1.msra.mxu0 0.0
      %1327 = vmatprep.subr.mxu0 0.0
      %1328 = vmatpush1.msra.mxu0 0.0
      %1329 = vmatprep.subr.mxu0 0.0
      %1330 = vmatpush1.msra.mxu0 0.0
      %1331 = vmatprep.subr.mxu0 0.0
      %1332 = vmatpush1.msra.mxu0 0.0
      %1333 = vmatprep.subr.mxu0 0.0
      %1334 = vmatpush1.msra.mxu0 0.0
      %1335 = vmatprep.subr.mxu0 0.0
      %1336 = vmatpush1.msra.mxu0 0.0
      %1337 = vmatprep.subr.mxu0 0.0
      %1338 = vmatpush1.msra.mxu0 0.0
      %1339 = vmatprep.subr.mxu0 0.0
      %1340 = vmatpush1.msra.mxu0 0.0
      %1341 = vmatprep.subr.mxu0 0.0
      %1342 = vmatpush1.msra.mxu0 0.0
      %1343 = vmatprep.subr.mxu0 0.0
      %1344 = vmatpush1.msra.mxu0 0.0
      %1345 = vmatprep.subr.mxu0 0.0
      %1346 = vmatpush1.msra.mxu0 0.0
      %1347 = vmatprep.subr.mxu0 0.0
      %1348 = vmatpush1.msra.mxu0 0.0
      %1349 = vmatprep.subr.mxu0 0.0
      %1350 = vmatpush1.msra.mxu0 0.0
      %1351 = vmatprep.subr.mxu0 0.0
      %1352 = vmatpush1.msra.mxu0 0.0
      %1353 = vmatprep.subr.mxu0 0.0
      %1354 = vmatpush1.msra.mxu0 0.0
      %1355 = vmatprep.subr.mxu0 0.0
      %1356 = vmatpush1.msra.mxu0 0.0
      %1357 = vmatprep.subr.mxu0 0.0
      %1358 = vmatpush1.msra.mxu0 0.0
      %1359 = vmatprep.subr.mxu0 0.0
      %1360 = vmatpush1.msra.mxu0 0.0
      %1361 = vmatprep.subr.mxu0 0.0
      %1362 = vmatpush1.msra.mxu0 0.0
      %1363 = vmatprep.subr.mxu0 0.0
      %1364 = vmatpush1.msra.mxu0 0.0
      %1365 = vmatprep.subr.mxu0 0.0
      %1366 = vmatpush1.msra.mxu0 0.0
      %1367 = vmatprep.subr.mxu0 0.0
      %1368 = vmatpush1.msra.mxu0 0.0
      %1369 = vmatprep.mubr.f32.mxu0 0.0
      %v1370 = vand.u32 %v798, 4294901760
      %1371 = vmatmul.mubr.f32.gmra.mrb[0].mxu0 %v1370
      %v1372 = vpop.f32.mrb[0].mxu0
      %v1373 = vadd.f32 %v1282, %v1372
      %v1374 = vpop.f32.mrb[0].mxu0
      %1375 = vmatprep.mubr.f32.mxu0 0.0
      %v1376 = vand.u32 %v800, 4294901760
      %1377 = vmatmul.mubr.f32.gmra.mrb[0].mxu0 %v1376
      %v1378 = vpop.f32.mrb[0].mxu0
      %v1379 = vadd.f32 %v1288, %v1378
      %v1380 = vpop.f32.mrb[0].mxu0
      %1381 = vmatprep.mubr.f32.mxu0 0.0
      %v1382 = vand.u32 %v802, 4294901760
      %1383 = vmatmul.mubr.f32.gmra.mrb[0].mxu0 %v1382
      %v1384 = vpop.f32.mrb[0].mxu0
      %v1385 = vadd.f32 %v1294, %v1384
      %v1386 = vpop.f32.mrb[0].mxu0
      %1387 = vmatprep.mubr.f32.mxu0 0.0
      %v1388 = vand.u32 %v804, 4294901760
      %1389 = vmatmul.mubr.f32.gmra.mrb[0].mxu0 %v1388
      %v1390 = vpop.f32.mrb[0].mxu0
      %v1391 = vadd.f32 %v1300, %v1390
      %v1392 = vpop.f32.mrb[0].mxu0
      %1393 = vdwg.mxu0
      %v1394 = vadd.f32 %v769, %v1373
      %v1395 = vadd.f32 %v775, %v1379
      %v1396 = vadd.f32 %v781, %v1385
      %v1397 = vadd.f32 %v787, %v1391
      %v1398 = vsub.f32 %v1373, %v769
      %v1399 = vsub.f32 %v1379, %v775
      %v1400 = vsub.f32 %v1385, %v781
      %v1401 = vsub.f32 %v1391, %v787
      %vm1402 = vcmask 64512
      %1403 = vst.msk [vmem:[%s181] sm:$0xff] %vm1402, %v1394
      %1404 = vst.msk [vmem:[%s181 + $0x8] sm:$0xff] %vm1402, %v1395
      %1405 = vst.msk [vmem:[%s181 + $0x10] sm:$0xff] %vm1402, %v1396
      %1406 = vst.msk [vmem:[%s181 + $0x18] sm:$0xff] %vm1402, %v1397
      %1411 = vrot.lane.b32.xlu0 %v1394, 120
      %v1412 = vpop.permute.xlu0 %1411
      %1413 = vrot.lane.b32.xlu0 %v1395, 120
      %v1414 = vpop.permute.xlu0 %1413
      %1415 = vrot.lane.b32.xlu0 %v1396, 120
      %v1416 = vpop.permute.xlu0 %1415
      %1417 = vrot.lane.b32.xlu0 %v1397, 120
      %v1418 = vpop.permute.xlu0 %1417
      %s1423 = scalar_lea.vmem %s181, 32
      %1424 = vst.msk [vmem:[%s1423] sm:$0xff] %vm1402, %v1412
      %1425 = vst.msk [vmem:[%s1423 + $0x8] sm:$0xff] %vm1402, %v1414
      %1426 = vst.msk [vmem:[%s1423 + $0x10] sm:$0xff] %vm1402, %v1416
      %1427 = vst.msk [vmem:[%s1423 + $0x18] sm:$0xff] %vm1402, %v1418
      %s1428 = scalar_lea.vmem %s181, 64
      %1429 = vst.msk [vmem:[%s1428] sm:$0xff] %vm1402, %v1398
      %1430 = vst.msk [vmem:[%s1428 + $0x8] sm:$0xff] %vm1402, %v1399
      %1431 = vst.msk [vmem:[%s1428 + $0x10] sm:$0xff] %vm1402, %v1400
      %1432 = vst.msk [vmem:[%s1428 + $0x18] sm:$0xff] %vm1402, %v1401
      %1437 = vrot.lane.b32.xlu0 %v1398, 120
      %v1438 = vpop.permute.xlu0 %1437
      %1439 = vrot.lane.b32.xlu0 %v1399, 120
      %v1440 = vpop.permute.xlu0 %1439
      %1441 = vrot.lane.b32.xlu0 %v1400, 120
      %v1442 = vpop.permute.xlu0 %1441
      %1443 = vrot.lane.b32.xlu0 %v1401, 120
      %v1444 = vpop.permute.xlu0 %1443
      %s1449 = scalar_lea.vmem %s181, 96
      %1450 = vst.msk [vmem:[%s1449] sm:$0xff] %vm1402, %v1438
      %1451 = vst.msk [vmem:[%s1449 + $0x8] sm:$0xff] %vm1402, %v1440
      %1452 = vst.msk [vmem:[%s1449 + $0x10] sm:$0xff] %vm1402, %v1442
      %1453 = vst.msk [vmem:[%s1449 + $0x18] sm:$0xff] %vm1402, %v1444
      %s1454 = smul.u32 4, %s18
      %p1455 = scmp.lt.s32.totalorder %s17, 1
      %s1456 = scalar_select %p1455, %s17, 1
      %p1457 = scmp.lt.s32.totalorder %s1454, 3
      %s1458 = scalar_select %p1457, %s1454, 3
      %s1459 = smul.addr %s1456, 16
      %s1460 = sadd.s32 %s1458, %s1459
      %s1461 = smul.addr %s1460, 8
      %s1462 = scalar_lea.vmem %s2, %s1461
      // Predicated region
      $region29: #{dwt.1} parent=27 // pred_check
        %p1463 = pneg %p94
      $region30: #{dwt.1} parent=27 // pred_check_branch
        %1465 = sbr.rel (%p1463) target = $region32
      $region31: #{dwt.1} parent=27 // pred_region
        %s1466 = smul.u32 4, %s18
      $region32: #{dwt.1} parent=27 // pred_fallthru
        _
    $region28: #{dwt.1} parent=5 // pred_fallthru
      _
    %p1467 = scmp.le.s32.totalorder 2, %s8
    // Predicated region
    $region33: #{dwt.1} parent=5 // pred_check
      %p1468 = pneg %p1467
    $region34: #{dwt.1} parent=5 // pred_check_branch
      %1470 = sbr.rel (%p1468) target = $region36
    $region35: #{dwt.1} parent=5 // pred_region
      %s1471 = ssub.s32 %s8, 2
      // Predicated region
      $region37: #{dwt.1} parent=35 // pred_check
        %p1472 = pneg %p100
      $region38: #{dwt.1} parent=35 // pred_check_branch
        %1474 = sbr.rel (%p1472) target = $region40
      $region39: #{dwt.1} parent=35 // pred_region
        %s1475 = smul.u32 4, %s20
        %p1476 = scmp.lt.s32.totalorder %s19, 1
        %s1477 = scalar_select %p1476, %s19, 1
        %p1478 = scmp.lt.s32.totalorder %s1475, 3
        %s1479 = scalar_select %p1478, %s1475, 3
        %s1480 = smul.addr %s1477, 16
        %s1481 = sadd.s32 %s1479, %s1480
        %s1482 = smul.addr %s1481, 8
        %s1483 = scalar_lea.vmem %s2, %s1482
      $region40: #{dwt.1} parent=35 // pred_fallthru
        _
    $region36: #{dwt.1} parent=5 // pred_fallthru
      _
  $region6: #{dwt.1} parent=0 // loop_footer
    %s12 = sadd.s32 1, %s8
  $region7: #{dwt.1} parent=0 // loop_footer_branch
    %7 = sbr.rel target = $region3
  $region8: #{dwt.1} parent=0 // loop_exit
    _

</llo_original>
